<compile_context>
chip_gen: v7x
topology: tpu7x:2x2x1
jax: 0.10.0
libtpu: 0.0.40
codegen_flags: <defaults>
</compile_context>

<pallas_src>
import math

import jax
import jax.numpy as jnp
from jax.experimental import pallas as pl
from jax.experimental.pallas import tpu as pltpu

# --------------------- model dimensions (lane-dense: last dims = 128) ---------------------
D = 128             # hidden width of the synthetic t2s / vits stacks
BERT_DIM = 128      # bert feature dim (real model: 1024)
SSL_DIM = 128       # ssl / hubert feature dim (real model: 768)
VOCAB_PHONE = 128   # phoneme vocabulary
VOCAB_SEM = 128     # semantic-code vocabulary
T_REF = 8           # reference phoneme length
T_TEXT = 8          # target phoneme length
T_ALL = T_REF + T_TEXT
T_SSL = 16          # ssl_content frames
REF_AUDIO_LEN = 512
FRAME = 128         # reference-audio framing for the style encoder
N_FRAMES = REF_AUDIO_LEN // FRAME
UPSAMPLE = 128      # samples produced per semantic token by the synthetic decoder

_ATT_SCALE = 1.0 / math.sqrt(D)


# ------------------- in-kernel matmul helpers (bf16 MXU, f32 accumulate) -------------------
def _mm(a, b):
    """[M,K] @ [K,N] -> [M,N] f32 (operands fed to the MXU in bf16)."""
    return jax.lax.dot_general(
        a.astype(jnp.bfloat16), b.astype(jnp.bfloat16),
        dimension_numbers=(((1,), (0,)), ((), ())),
        preferred_element_type=jnp.float32)


def _mm_ta(a, b):
    """[K,M]^T @ [K,N] -> [M,N]: contract leading dims. Folds the channel-first
    layout of bert/ssl into the matmul (no wrapper .T, no in-kernel transpose)."""
    return jax.lax.dot_general(
        a.astype(jnp.bfloat16), b.astype(jnp.bfloat16),
        dimension_numbers=(((0,), (0,)), ((), ())),
        preferred_element_type=jnp.float32)


def _mm_tb(a, b):
    """[M,K] @ [N,K]^T -> [M,N]: contract trailing dims (q·kᵀ without k.T)."""
    return jax.lax.dot_general(
        a.astype(jnp.bfloat16), b.astype(jnp.bfloat16),
        dimension_numbers=(((1,), (1,)), ((), ())),
        preferred_element_type=jnp.float32)


# -------------------------------- fused t2s kernel --------------------------------
def _t2s_kernel(phone_ref, bert_ref, ssl_ref,
                bert_w_ref, bert_b_ref, ssl_w_ref, ssl_b_ref,
                wq_ref, bq_ref, wkv_ref, bkv_ref,
                ff1_w_ref, ff1_b_ref, ff2_w_ref, ff2_b_ref,
                vocab_w_ref, vocab_b_ref,
                pred_ref):
    # phoneme + bert fusion (channel-first bert folded into the contraction)
    x = phone_ref[...] + _mm_ta(bert_ref[...], bert_w_ref[...]) + bert_b_ref[...]    # [T_ALL, D]
    ssl = _mm_ta(ssl_ref[...], ssl_w_ref[...]) + ssl_b_ref[...]                      # [T_SSL, D]

    # Q from x; K|V fused into one wide matmul from ssl
    q = _mm(x, wq_ref[...]) + bq_ref[...]                                            # [T_ALL, D]
    kv = _mm(ssl, wkv_ref[...]) + bkv_ref[...]                                       # [T_SSL, 2D]
    k = kv[:, :D]
    v = kv[:, D:]

    # single-head cross-attention; softmax math kept in f32 (v5e-safe)
    s = _mm_tb(q, k) * _ATT_SCALE                                                    # [T_ALL, T_SSL]
    m = jnp.max(s, axis=-1, keepdims=True)
    p = jnp.exp(s - m)
    l = jnp.sum(p, axis=-1, keepdims=True)
    o = _mm(p, v) * pl.reciprocal(l, approx=True)                                    # EUP reciprocal
    h = x + o

    # FFN
    h1 = jnp.maximum(_mm(h, ff1_w_ref[...]) + ff1_b_ref[...], 0.0)
    h = h + _mm(h1, ff2_w_ref[...]) + ff2_b_ref[...]

    # vocab logits + fused argmax (first occurrence of the max, like jnp.argmax)
    logits = _mm(h, vocab_w_ref[...]) + vocab_b_ref[...]                             # [T_ALL, VOCAB_SEM]
    mmax = jnp.max(logits, axis=-1, keepdims=True)
    idx = jax.lax.broadcasted_iota(jnp.int32, logits.shape, 1).astype(jnp.float32)
    neg = jnp.where(logits == mmax, -idx, -jnp.inf)
    pred_ref[...] = (-jnp.max(neg, axis=-1, keepdims=True)).astype(jnp.int32)        # [T_ALL, 1]


# -------------------------------- fused vits kernel --------------------------------
def _vits_kernel(e_ref, text_ref, frames_ref,
                 ref_w_ref, ref_b_ref,
                 dec_w1_ref, dec_b1_ref, dec_w2_ref, dec_b2_ref,
                 o_ref):
    # style encoder: matmul + mean-pool over frames -> global style vector
    style_h = _mm(frames_ref[...], ref_w_ref[...]) + ref_b_ref[...]                  # [N_FRAMES, D]
    style = jnp.mean(style_h, axis=0, keepdims=True)                                 # [1, D]
    text_mean = jnp.mean(text_ref[...], axis=0, keepdims=True)                       # [1, D]

    # fused MLP upsampling decoder
    h = e_ref[...] + style + text_mean                                               # [T_ALL, D]
    h1 = jnp.maximum(_mm(h, dec_w1_ref[...]) + dec_b1_ref[...], 0.0)
    y = _mm(h1, dec_w2_ref[...]) + dec_b2_ref[...]
    o_ref[...] = jnp.tanh(y)                                                         # [T_ALL, UPSAMPLE]


# -------------------------------- pallas_call plumbing --------------------------------
def _full(shape):
    """Whole-array block (legal even when dims < (8,128) because block == array)."""
    return pl.BlockSpec(shape, lambda i, _n=len(shape): (0,) * _n)


_COMPILER_PARAMS = pltpu.CompilerParams(dimension_semantics=("arbitrary",))


# ------------------------------------ parameter init ------------------------------------
def init_params(key):
    keys = jax.random.split(key, 22)
    s = 0.05

    def wgt(k, shape):   # matmul weights stored bf16: MXU-native, halves DMA bytes
        return (jax.random.normal(k, shape, jnp.float32) * s).astype(jnp.bfloat16)

    def bias(k, n):      # biases pre-shaped (1, N) once at init (no per-call reshape)
        return jax.random.normal(k, (1, n), jnp.float32) * s

    def emb(k, shape):   # embedding tables stay f32 (gathered in the XLA wrapper)
        return jax.random.normal(k, shape, jnp.float32) * s

    return {
        "phone_emb": emb(keys[0], (VOCAB_PHONE, D)),
        "bert_w": wgt(keys[1], (BERT_DIM, D)),    "bert_b": bias(keys[2], D),
        "ssl_w":  wgt(keys[3], (SSL_DIM, D)),     "ssl_b":  bias(keys[4], D),
        "wq":     wgt(keys[5], (D, D)),           "bq":     bias(keys[6], D),
        "wkv":    wgt(keys[7], (D, 2 * D)),       "bkv":    bias(keys[8], 2 * D),
        "ff1_w":  wgt(keys[9], (D, D)),           "ff1_b":  bias(keys[10], D),
        "ff2_w":  wgt(keys[11], (D, D)),          "ff2_b":  bias(keys[12], D),
        "vocab_w": wgt(keys[13], (D, VOCAB_SEM)), "vocab_b": bias(keys[14], VOCAB_SEM),
        "code_emb": emb(keys[15], (VOCAB_SEM, D)),
        "ref_w":  wgt(keys[16], (FRAME, D)),      "ref_b":  bias(keys[17], D),
        "dec_w1": wgt(keys[18], (D, D)),          "dec_b1": bias(keys[19], D),
        "dec_w2": wgt(keys[20], (D, UPSAMPLE)),   "dec_b2": bias(keys[21], UPSAMPLE),
    }


# -------------------------------------- forward pass --------------------------------------
def t2s_forward(p, ref_seq, text_seq, ref_bert, text_bert, ssl_content):
    # TODO(synk): the real t2s is an external autoregressive transformer module; here it is a
    # single fused non-autoregressive cross-attention block with the same I/O contract.
    seq = jnp.concatenate([ref_seq[0], text_seq[0]], axis=0)                # [T_ALL]
    phone = jnp.take(p["phone_emb"], seq, axis=0)                           # [T_ALL, D]
    # keep bert/ssl channel-first; transpose is folded into dot_general inside the kernel
    bert_cf = jnp.concatenate([ref_bert[0], text_bert[0]], axis=1)          # [BERT_DIM, T_ALL]
    ssl_cf = ssl_content[0]                                                 # [SSL_DIM, T_SSL]

    inputs = (phone, bert_cf, ssl_cf,
              p["bert_w"], p["bert_b"], p["ssl_w"], p["ssl_b"],
              p["wq"], p["bq"], p["wkv"], p["bkv"],
              p["ff1_w"], p["ff1_b"], p["ff2_w"], p["ff2_b"],
              p["vocab_w"], p["vocab_b"])

    pred = pl.pallas_call(
        _t2s_kernel,
        out_shape=jax.ShapeDtypeStruct((T_ALL, 1), jnp.int32),
        grid=(1,),
        in_specs=[_full(a.shape) for a in inputs],
        out_specs=_full((T_ALL, 1)),
        compiler_params=_COMPILER_PARAMS,
        cost_estimate=pl.CostEstimate(flops=4_325_376, transcendentals=288,
                                      bytes_accessed=360_000),
    )(*inputs)
    return pred[:, 0][None, None, :]                                        # [1, 1, T_ALL]


def vits_forward(p, text_seq, pred_semantic, ref_audio):
    # TODO(synk): the real decoder is an external .onnx VITS graph; replaced by a fused
    # Pallas style-encoder + MLP upsampling decoder with matching I/O.
    codes = pred_semantic[0, 0]                                             # [T_ALL]
    e = jnp.take(p["code_emb"], codes, axis=0)                              # [T_ALL, D]
    text_emb = jnp.take(p["phone_emb"], text_seq[0], axis=0)                # [T_TEXT, D]
    frames = ref_audio.reshape(N_FRAMES, FRAME)                             # [N_FRAMES, FRAME]

    inputs = (e, text_emb, frames,
              p["ref_w"], p["ref_b"],
              p["dec_w1"], p["dec_b1"], p["dec_w2"], p["dec_b2"])

    out = pl.pallas_call(
        _vits_kernel,
        out_shape=jax.ShapeDtypeStruct((T_ALL, UPSAMPLE), jnp.float32),
        grid=(1,),
        in_specs=[_full(a.shape) for a in inputs],
        out_specs=_full((T_ALL, UPSAMPLE)),
        compiler_params=_COMPILER_PARAMS,
        cost_estimate=pl.CostEstimate(flops=1_200_000, transcendentals=2_064,
                                      bytes_accessed=260_000),
    )(*inputs)
    return out.reshape(1, -1)                                               # [1, T_ALL*UPSAMPLE]


def gpt_sovits_forward(p, ref_seq, text_seq, ref_bert, text_bert, ref_audio, ssl_content):
    pred_semantic = t2s_forward(p, ref_seq, text_seq, ref_bert, text_bert, ssl_content)
    audio = vits_forward(p, text_seq, pred_semantic, ref_audio)
    return audio


# ------------------------------------------ main ------------------------------------------
if __name__ == "__main__":
    key = jax.random.PRNGKey(0)
    kp, k1, k2, k3, k4, k5, k6 = jax.random.split(key, 7)

    params = init_params(kp)

    ref_seq = jax.random.randint(k1, (1, T_REF), 0, VOCAB_PHONE, dtype=jnp.int32)
    text_seq = jax.random.randint(k2, (1, T_TEXT), 0, VOCAB_PHONE, dtype=jnp.int32)
    ref_bert = jax.random.normal(k3, (1, BERT_DIM, T_REF), jnp.float32)
    text_bert = jax.random.normal(k4, (1, BERT_DIM, T_TEXT), jnp.float32)
    ref_audio = jax.random.normal(k5, (1, REF_AUDIO_LEN), jnp.float32)
    ssl_content = jax.random.normal(k6, (1, SSL_DIM, T_SSL), jnp.float32)

    fwd = jax.jit(gpt_sovits_forward)
    audio = fwd(params, ref_seq, text_seq, ref_bert, text_bert, ref_audio, ssl_content)
    jax.block_until_ready(audio)

    assert audio.shape == (1, T_ALL * UPSAMPLE)
    assert audio.dtype == jnp.float32
    print("KERNEL_OK")
</pallas_src>

<mosaic_0001>
module attributes {stable_mosaic.version = 11 : i64} {
  func.func @_t2s_kernel(%arg0: i32, %arg1: memref<16x128xf32, #tpu.memory_space<vmem>>, %arg2: memref<128x16xf32, #tpu.memory_space<vmem>>, %arg3: memref<128x16xf32, #tpu.memory_space<vmem>>, %arg4: memref<128x128xbf16, #tpu.memory_space<vmem>>, %arg5: memref<1x128xf32, #tpu.memory_space<vmem>>, %arg6: memref<128x128xbf16, #tpu.memory_space<vmem>>, %arg7: memref<1x128xf32, #tpu.memory_space<vmem>>, %arg8: memref<128x128xbf16, #tpu.memory_space<vmem>>, %arg9: memref<1x128xf32, #tpu.memory_space<vmem>>, %arg10: memref<128x256xbf16, #tpu.memory_space<vmem>>, %arg11: memref<1x256xf32, #tpu.memory_space<vmem>>, %arg12: memref<128x128xbf16, #tpu.memory_space<vmem>>, %arg13: memref<1x128xf32, #tpu.memory_space<vmem>>, %arg14: memref<128x128xbf16, #tpu.memory_space<vmem>>, %arg15: memref<1x128xf32, #tpu.memory_space<vmem>>, %arg16: memref<128x128xbf16, #tpu.memory_space<vmem>>, %arg17: memref<1x128xf32, #tpu.memory_space<vmem>>, %arg18: memref<16x1xi32, #tpu.memory_space<vmem>>) attributes {dimension_semantics = [#tpu.dimension_semantics<arbitrary>], iteration_bounds = array<i64: 1>, scalar_prefetch = 0 : i64, scratch_operands = 0 : i64, tpu.core_type = #tpu.core_type<tc>, window_params = [{pipeline_mode = #tpu.pipeline_mode<synchronous>, transform_indices = @transform_0, window_bounds = array<i64: 16, 128>}, {pipeline_mode = #tpu.pipeline_mode<synchronous>, transform_indices = @transform_1, window_bounds = array<i64: 128, 16>}, {pipeline_mode = #tpu.pipeline_mode<synchronous>, transform_indices = @transform_2, window_bounds = array<i64: 128, 16>}, {pipeline_mode = #tpu.pipeline_mode<synchronous>, transform_indices = @transform_3, window_bounds = array<i64: 128, 128>}, {pipeline_mode = #tpu.pipeline_mode<synchronous>, transform_indices = @transform_4, window_bounds = array<i64: 1, 128>}, {pipeline_mode = #tpu.pipeline_mode<synchronous>, transform_indices = @transform_5, window_bounds = array<i64: 128, 128>}, {pipeline_mode = #tpu.pipeline_mode<synchronous>, transform_indices = @transform_6, window_bounds = array<i64: 1, 128>}, {pipeline_mode = #tpu.pipeline_mode<synchronous>, transform_indices = @transform_7, window_bounds = array<i64: 128, 128>}, {pipeline_mode = #tpu.pipeline_mode<synchronous>, transform_indices = @transform_8, window_bounds = array<i64: 1, 128>}, {pipeline_mode = #tpu.pipeline_mode<synchronous>, transform_indices = @transform_9, window_bounds = array<i64: 128, 256>}, {pipeline_mode = #tpu.pipeline_mode<synchronous>, transform_indices = @transform_10, window_bounds = array<i64: 1, 256>}, {pipeline_mode = #tpu.pipeline_mode<synchronous>, transform_indices = @transform_11, window_bounds = array<i64: 128, 128>}, {pipeline_mode = #tpu.pipeline_mode<synchronous>, transform_indices = @transform_12, window_bounds = array<i64: 1, 128>}, {pipeline_mode = #tpu.pipeline_mode<synchronous>, transform_indices = @transform_13, window_bounds = array<i64: 128, 128>}, {pipeline_mode = #tpu.pipeline_mode<synchronous>, transform_indices = @transform_14, window_bounds = array<i64: 1, 128>}, {pipeline_mode = #tpu.pipeline_mode<synchronous>, transform_indices = @transform_15, window_bounds = array<i64: 128, 128>}, {pipeline_mode = #tpu.pipeline_mode<synchronous>, transform_indices = @transform_16, window_bounds = array<i64: 1, 128>}, {pipeline_mode = #tpu.pipeline_mode<synchronous>, transform_indices = @transform_17, window_bounds = array<i64: 16, 1>}]} {
    %c0 = arith.constant 0 : index
    %c0_0 = arith.constant 0 : index
    %0 = vector.load %arg1[%c0, %c0_0] : memref<16x128xf32, #tpu.memory_space<vmem>>, vector<16x128xf32>
    %c0_1 = arith.constant 0 : index
    %c0_2 = arith.constant 0 : index
    %1 = vector.load %arg2[%c0_1, %c0_2] : memref<128x16xf32, #tpu.memory_space<vmem>>, vector<128x16xf32>
    %c0_3 = arith.constant 0 : index
    %c0_4 = arith.constant 0 : index
    %2 = vector.load %arg4[%c0_3, %c0_4] : memref<128x128xbf16, #tpu.memory_space<vmem>>, vector<128x128xbf16>
    %3 = arith.truncf %1 : vector<128x16xf32> to vector<128x16xbf16>
    %cst = arith.constant dense<0.000000e+00> : vector<16x128xf32>
    %4 = tpu.matmul %3, %2, %cst {dimension_numbers = #tpu.dot_dimension_numbers<[0], [0], [1], [1], [0, 1, 1, 1], [], []>} : vector<128x16xbf16>, vector<128x128xbf16>, vector<16x128xf32> -> vector<16x128xf32>
    %5 = arith.addf %0, %4 : vector<16x128xf32>
    %c0_5 = arith.constant 0 : index
    %c0_6 = arith.constant 0 : index
    %6 = vector.load %arg5[%c0_5, %c0_6] : memref<1x128xf32, #tpu.memory_space<vmem>>, vector<1x128xf32>
    %7 = vector.broadcast %6 : vector<1x128xf32> to vector<16x128xf32>
    %8 = arith.addf %5, %7 : vector<16x128xf32>
    %c0_7 = arith.constant 0 : index
    %c0_8 = arith.constant 0 : index
    %9 = vector.load %arg3[%c0_7, %c0_8] : memref<128x16xf32, #tpu.memory_space<vmem>>, vector<128x16xf32>
    %c0_9 = arith.constant 0 : index
    %c0_10 = arith.constant 0 : index
    %10 = vector.load %arg6[%c0_9, %c0_10] : memref<128x128xbf16, #tpu.memory_space<vmem>>, vector<128x128xbf16>
    %11 = arith.truncf %9 : vector<128x16xf32> to vector<128x16xbf16>
    %cst_11 = arith.constant dense<0.000000e+00> : vector<16x128xf32>
    %12 = tpu.matmul %11, %10, %cst_11 {dimension_numbers = #tpu.dot_dimension_numbers<[0], [0], [1], [1], [0, 1, 1, 1], [], []>} : vector<128x16xbf16>, vector<128x128xbf16>, vector<16x128xf32> -> vector<16x128xf32>
    %c0_12 = arith.constant 0 : index
    %c0_13 = arith.constant 0 : index
    %13 = vector.load %arg7[%c0_12, %c0_13] : memref<1x128xf32, #tpu.memory_space<vmem>>, vector<1x128xf32>
    %14 = vector.broadcast %13 : vector<1x128xf32> to vector<16x128xf32>
    %15 = arith.addf %12, %14 : vector<16x128xf32>
    %c0_14 = arith.constant 0 : index
    %c0_15 = arith.constant 0 : index
    %16 = vector.load %arg8[%c0_14, %c0_15] : memref<128x128xbf16, #tpu.memory_space<vmem>>, vector<128x128xbf16>
    %17 = arith.truncf %8 : vector<16x128xf32> to vector<16x128xbf16>
    %cst_16 = arith.constant dense<0.000000e+00> : vector<16x128xf32>
    %18 = tpu.matmul %17, %16, %cst_16 {dimension_numbers = #tpu.dot_dimension_numbers<[1], [0], [0], [1], [0, 0, 1, 1], [], []>} : vector<16x128xbf16>, vector<128x128xbf16>, vector<16x128xf32> -> vector<16x128xf32>
    %c0_17 = arith.constant 0 : index
    %c0_18 = arith.constant 0 : index
    %19 = vector.load %arg9[%c0_17, %c0_18] : memref<1x128xf32, #tpu.memory_space<vmem>>, vector<1x128xf32>
    %20 = vector.broadcast %19 : vector<1x128xf32> to vector<16x128xf32>
    %21 = arith.addf %18, %20 : vector<16x128xf32>
    %c0_19 = arith.constant 0 : index
    %c0_20 = arith.constant 0 : index
    %22 = vector.load %arg10[%c0_19, %c0_20] : memref<128x256xbf16, #tpu.memory_space<vmem>>, vector<128x256xbf16>
    %23 = arith.truncf %15 : vector<16x128xf32> to vector<16x128xbf16>
    %cst_21 = arith.constant dense<0.000000e+00> : vector<16x256xf32>
    %24 = tpu.matmul %23, %22, %cst_21 {dimension_numbers = #tpu.dot_dimension_numbers<[1], [0], [0], [1], [0, 0, 1, 1], [], []>} : vector<16x128xbf16>, vector<128x256xbf16>, vector<16x256xf32> -> vector<16x256xf32>
    %c0_22 = arith.constant 0 : index
    %c0_23 = arith.constant 0 : index
    %25 = vector.load %arg11[%c0_22, %c0_23] : memref<1x256xf32, #tpu.memory_space<vmem>>, vector<1x256xf32>
    %26 = vector.broadcast %25 : vector<1x256xf32> to vector<16x256xf32>
    %27 = arith.addf %24, %26 : vector<16x256xf32>
    %28 = vector.extract_strided_slice %27 {offsets = [0, 0], sizes = [16, 128], strides = [1, 1]} : vector<16x256xf32> to vector<16x128xf32>
    %29 = vector.extract_strided_slice %27 {offsets = [0, 128], sizes = [16, 128], strides = [1, 1]} : vector<16x256xf32> to vector<16x128xf32>
    %30 = arith.truncf %21 : vector<16x128xf32> to vector<16x128xbf16>
    %31 = arith.truncf %28 : vector<16x128xf32> to vector<16x128xbf16>
    %cst_24 = arith.constant dense<0.000000e+00> : vector<16x16xf32>
    %32 = tpu.matmul %30, %31, %cst_24 {dimension_numbers = #tpu.dot_dimension_numbers<[1], [1], [0], [0], [0, 0, 1, 0], [], []>} : vector<16x128xbf16>, vector<16x128xbf16>, vector<16x16xf32> -> vector<16x16xf32>
    %cst_25 = arith.constant 0.0883883461 : f32
    %33 = vector.broadcast %cst_25 : f32 to vector<16x16xf32>
    %34 = arith.mulf %32, %33 : vector<16x16xf32>
    %cst_26 = arith.constant dense<0xFF800000> : vector<16xf32>
    %35 = vector.multi_reduction <maximumf>, %34, %cst_26 [1] : vector<16x16xf32> to vector<16xf32>
    %36 = vector.shape_cast %35 : vector<16xf32> to vector<16x1xf32>
    %37 = vector.broadcast %36 : vector<16x1xf32> to vector<16x16xf32>
    %38 = arith.subf %34, %37 : vector<16x16xf32>
    %39 = math.exp %38 : vector<16x16xf32>
    %cst_27 = arith.constant dense<0.000000e+00> : vector<16xf32>
    %40 = vector.multi_reduction <add>, %39, %cst_27 [1] : vector<16x16xf32> to vector<16xf32>
    %41 = vector.shape_cast %40 : vector<16xf32> to vector<16x1xf32>
    %42 = arith.truncf %39 : vector<16x16xf32> to vector<16x16xbf16>
    %43 = arith.truncf %29 : vector<16x128xf32> to vector<16x128xbf16>
    %cst_28 = arith.constant dense<0.000000e+00> : vector<16x128xf32>
    %44 = tpu.matmul %42, %43, %cst_28 {dimension_numbers = #tpu.dot_dimension_numbers<[1], [0], [0], [1], [0, 0, 1, 1], [], []>} : vector<16x16xbf16>, vector<16x128xbf16>, vector<16x128xf32> -> vector<16x128xf32>
    %45 = tpu.reciprocal %41 {approx = true} : vector<16x1xf32> -> vector<16x1xf32>
    %46 = vector.broadcast %45 : vector<16x1xf32> to vector<16x128xf32>
    %47 = arith.mulf %44, %46 : vector<16x128xf32>
    %48 = arith.addf %8, %47 : vector<16x128xf32>
    %c0_29 = arith.constant 0 : index
    %c0_30 = arith.constant 0 : index
    %49 = vector.load %arg12[%c0_29, %c0_30] : memref<128x128xbf16, #tpu.memory_space<vmem>>, vector<128x128xbf16>
    %50 = arith.truncf %48 : vector<16x128xf32> to vector<16x128xbf16>
    %cst_31 = arith.constant dense<0.000000e+00> : vector<16x128xf32>
    %51 = tpu.matmul %50, %49, %cst_31 {dimension_numbers = #tpu.dot_dimension_numbers<[1], [0], [0], [1], [0, 0, 1, 1], [], []>} : vector<16x128xbf16>, vector<128x128xbf16>, vector<16x128xf32> -> vector<16x128xf32>
    %c0_32 = arith.constant 0 : index
    %c0_33 = arith.constant 0 : index
    %52 = vector.load %arg13[%c0_32, %c0_33] : memref<1x128xf32, #tpu.memory_space<vmem>>, vector<1x128xf32>
    %53 = vector.broadcast %52 : vector<1x128xf32> to vector<16x128xf32>
    %54 = arith.addf %51, %53 : vector<16x128xf32>
    %cst_34 = arith.constant 0.000000e+00 : f32
    %55 = vector.broadcast %cst_34 : f32 to vector<16x128xf32>
    %56 = arith.maximumf %54, %55 : vector<16x128xf32>
    %c0_35 = arith.constant 0 : index
    %c0_36 = arith.constant 0 : index
    %57 = vector.load %arg14[%c0_35, %c0_36] : memref<128x128xbf16, #tpu.memory_space<vmem>>, vector<128x128xbf16>
    %58 = arith.truncf %56 : vector<16x128xf32> to vector<16x128xbf16>
    %cst_37 = arith.constant dense<0.000000e+00> : vector<16x128xf32>
    %59 = tpu.matmul %58, %57, %cst_37 {dimension_numbers = #tpu.dot_dimension_numbers<[1], [0], [0], [1], [0, 0, 1, 1], [], []>} : vector<16x128xbf16>, vector<128x128xbf16>, vector<16x128xf32> -> vector<16x128xf32>
    %60 = arith.addf %48, %59 : vector<16x128xf32>
    %c0_38 = arith.constant 0 : index
    %c0_39 = arith.constant 0 : index
    %61 = vector.load %arg15[%c0_38, %c0_39] : memref<1x128xf32, #tpu.memory_space<vmem>>, vector<1x128xf32>
    %62 = vector.broadcast %61 : vector<1x128xf32> to vector<16x128xf32>
    %63 = arith.addf %60, %62 : vector<16x128xf32>
    %c0_40 = arith.constant 0 : index
    %c0_41 = arith.constant 0 : index
    %64 = vector.load %arg16[%c0_40, %c0_41] : memref<128x128xbf16, #tpu.memory_space<vmem>>, vector<128x128xbf16>
    %65 = arith.truncf %63 : vector<16x128xf32> to vector<16x128xbf16>
    %cst_42 = arith.constant dense<0.000000e+00> : vector<16x128xf32>
    %66 = tpu.matmul %65, %64, %cst_42 {dimension_numbers = #tpu.dot_dimension_numbers<[1], [0], [0], [1], [0, 0, 1, 1], [], []>} : vector<16x128xbf16>, vector<128x128xbf16>, vector<16x128xf32> -> vector<16x128xf32>
    %c0_43 = arith.constant 0 : index
    %c0_44 = arith.constant 0 : index
    %67 = vector.load %arg17[%c0_43, %c0_44] : memref<1x128xf32, #tpu.memory_space<vmem>>, vector<1x128xf32>
    %68 = vector.broadcast %67 : vector<1x128xf32> to vector<16x128xf32>
    %69 = arith.addf %66, %68 : vector<16x128xf32>
    %cst_45 = arith.constant dense<0xFF800000> : vector<16xf32>
    %70 = vector.multi_reduction <maximumf>, %69, %cst_45 [1] : vector<16x128xf32> to vector<16xf32>
    %71 = vector.shape_cast %70 : vector<16xf32> to vector<16x1xf32>
    %72 = tpu.iota {dimensions = array<i32: 1>} : vector<16x128xi32>
    %73 = arith.sitofp %72 : vector<16x128xi32> to vector<16x128xf32>
    %74 = vector.broadcast %71 : vector<16x1xf32> to vector<16x128xf32>
    %75 = arith.cmpf oeq, %69, %74 : vector<16x128xf32>
    %cst_46 = arith.constant 0.000000e+00 : f32
    %76 = vector.broadcast %cst_46 : f32 to vector<16x128xf32>
    %77 = arith.subf %76, %73 : vector<16x128xf32>
    %cst_47 = arith.constant 0xFF800000 : f32
    %78 = vector.broadcast %cst_47 : f32 to vector<16x128xf32>
    %79 = arith.select %75, %77, %78 : vector<16x128xi1>, vector<16x128xf32>
    %cst_48 = arith.constant dense<0xFF800000> : vector<16xf32>
    %80 = vector.multi_reduction <maximumf>, %79, %cst_48 [1] : vector<16x128xf32> to vector<16xf32>
    %81 = vector.shape_cast %80 : vector<16xf32> to vector<16x1xf32>
    %cst_49 = arith.constant 0.000000e+00 : f32
    %82 = vector.broadcast %cst_49 : f32 to vector<16x1xf32>
    %83 = arith.subf %82, %81 : vector<16x1xf32>
    %84 = arith.fptosi %83 : vector<16x1xf32> to vector<16x1xi32>
    %c0_50 = arith.constant 0 : index
    %c0_51 = arith.constant 0 : index
    %85 = vector.load %arg18[%c0_50, %c0_51] : memref<16x1xi32, #tpu.memory_space<vmem>>, vector<16x1xi32>
    tpu.vector_store %arg18[%c0_50, %c0_51], %84 {strides = array<i32>} : memref<16x1xi32, #tpu.memory_space<vmem>>, vector<16x1xi32>,
    return
  }
  func.func @transform_0(%arg0: i32) -> (i32, i32) {
    %c0_i32 = arith.constant 0 : i32
    %c0_i32_0 = arith.constant 0 : i32
    %c0_i32_1 = arith.constant 0 : i32
    return %c0_i32, %c0_i32_0 : i32, i32
  }
  func.func @transform_1(%arg0: i32) -> (i32, i32) {
    %c0_i32 = arith.constant 0 : i32
    %c0_i32_0 = arith.constant 0 : i32
    %c0_i32_1 = arith.constant 0 : i32
    return %c0_i32, %c0_i32_0 : i32, i32
  }
  func.func @transform_2(%arg0: i32) -> (i32, i32) {
    %c0_i32 = arith.constant 0 : i32
    %c0_i32_0 = arith.constant 0 : i32
    %c0_i32_1 = arith.constant 0 : i32
    return %c0_i32, %c0_i32_0 : i32, i32
  }
  func.func @transform_3(%arg0: i32) -> (i32, i32) {
    %c0_i32 = arith.constant 0 : i32
    %c0_i32_0 = arith.constant 0 : i32
    %c0_i32_1 = arith.constant 0 : i32
    return %c0_i32, %c0_i32_0 : i32, i32
  }
  func.func @transform_4(%arg0: i32) -> (i32, i32) {
    %c0_i32 = arith.constant 0 : i32
    %c0_i32_0 = arith.constant 0 : i32
    %c0_i32_1 = arith.constant 0 : i32
    return %c0_i32, %c0_i32_0 : i32, i32
  }
  func.func @transform_5(%arg0: i32) -> (i32, i32) {
    %c0_i32 = arith.constant 0 : i32
    %c0_i32_0 = arith.constant 0 : i32
    %c0_i32_1 = arith.constant 0 : i32
    return %c0_i32, %c0_i32_0 : i32, i32
  }
  func.func @transform_6(%arg0: i32) -> (i32, i32) {
    %c0_i32 = arith.constant 0 : i32
    %c0_i32_0 = arith.constant 0 : i32
    %c0_i32_1 = arith.constant 0 : i32
    return %c0_i32, %c0_i32_0 : i32, i32
  }
  func.func @transform_7(%arg0: i32) -> (i32, i32) {
    %c0_i32 = arith.constant 0 : i32
    %c0_i32_0 = arith.constant 0 : i32
    %c0_i32_1 = arith.constant 0 : i32
    return %c0_i32, %c0_i32_0 : i32, i32
  }
  func.func @transform_8(%arg0: i32) -> (i32, i32) {
    %c0_i32 = arith.constant 0 : i32
    %c0_i32_0 = arith.constant 0 : i32
    %c0_i32_1 = arith.constant 0 : i32
    return %c0_i32, %c0_i32_0 : i32, i32
  }
  func.func @transform_9(%arg0: i32) -> (i32, i32) {
    %c0_i32 = arith.constant 0 : i32
    %c0_i32_0 = arith.constant 0 : i32
    %c0_i32_1 = arith.constant 0 : i32
    return %c0_i32, %c0_i32_0 : i32, i32
  }
  func.func @transform_10(%arg0: i32) -> (i32, i32) {
    %c0_i32 = arith.constant 0 : i32
    %c0_i32_0 = arith.constant 0 : i32
    %c0_i32_1 = arith.constant 0 : i32
    return %c0_i32, %c0_i32_0 : i32, i32
  }
  func.func @transform_11(%arg0: i32) -> (i32, i32) {
    %c0_i32 = arith.constant 0 : i32
    %c0_i32_0 = arith.constant 0 : i32
    %c0_i32_1 = arith.constant 0 : i32
    return %c0_i32, %c0_i32_0 : i32, i32
  }
  func.func @transform_12(%arg0: i32) -> (i32, i32) {
    %c0_i32 = arith.constant 0 : i32
    %c0_i32_0 = arith.constant 0 : i32
    %c0_i32_1 = arith.constant 0 : i32
    return %c0_i32, %c0_i32_0 : i32, i32
  }
  func.func @transform_13(%arg0: i32) -> (i32, i32) {
    %c0_i32 = arith.constant 0 : i32
    %c0_i32_0 = arith.constant 0 : i32
    %c0_i32_1 = arith.constant 0 : i32
    return %c0_i32, %c0_i32_0 : i32, i32
  }
  func.func @transform_14(%arg0: i32) -> (i32, i32) {
    %c0_i32 = arith.constant 0 : i32
    %c0_i32_0 = arith.constant 0 : i32
    %c0_i32_1 = arith.constant 0 : i32
    return %c0_i32, %c0_i32_0 : i32, i32
  }
  func.func @transform_15(%arg0: i32) -> (i32, i32) {
    %c0_i32 = arith.constant 0 : i32
    %c0_i32_0 = arith.constant 0 : i32
    %c0_i32_1 = arith.constant 0 : i32
    return %c0_i32, %c0_i32_0 : i32, i32
  }
  func.func @transform_16(%arg0: i32) -> (i32, i32) {
    %c0_i32 = arith.constant 0 : i32
    %c0_i32_0 = arith.constant 0 : i32
    %c0_i32_1 = arith.constant 0 : i32
    return %c0_i32, %c0_i32_0 : i32, i32
  }
  func.func @transform_17(%arg0: i32) -> (i32, i32) {
    %c0_i32 = arith.constant 0 : i32
    %c0_i32_0 = arith.constant 0 : i32
    %c0_i32_1 = arith.constant 0 : i32
    return %c0_i32, %c0_i32_0 : i32, i32
  }
}

module attributes {stable_mosaic.version = 11 : i64} {
  func.func @_vits_kernel(%arg0: i32, %arg1: memref<16x128xf32, #tpu.memory_space<vmem>>, %arg2: memref<8x128xf32, #tpu.memory_space<vmem>>, %arg3: memref<4x128xf32, #tpu.memory_space<vmem>>, %arg4: memref<128x128xbf16, #tpu.memory_space<vmem>>, %arg5: memref<1x128xf32, #tpu.memory_space<vmem>>, %arg6: memref<128x128xbf16, #tpu.memory_space<vmem>>, %arg7: memref<1x128xf32, #tpu.memory_space<vmem>>, %arg8: memref<128x128xbf16, #tpu.memory_space<vmem>>, %arg9: memref<1x128xf32, #tpu.memory_space<vmem>>, %arg10: memref<16x128xf32, #tpu.memory_space<vmem>>) attributes {dimension_semantics = [#tpu.dimension_semantics<arbitrary>], iteration_bounds = array<i64: 1>, scalar_prefetch = 0 : i64, scratch_operands = 0 : i64, tpu.core_type = #tpu.core_type<tc>, window_params = [{pipeline_mode = #tpu.pipeline_mode<synchronous>, transform_indices = @transform_0, window_bounds = array<i64: 16, 128>}, {pipeline_mode = #tpu.pipeline_mode<synchronous>, transform_indices = @transform_1, window_bounds = array<i64: 8, 128>}, {pipeline_mode = #tpu.pipeline_mode<synchronous>, transform_indices = @transform_2, window_bounds = array<i64: 4, 128>}, {pipeline_mode = #tpu.pipeline_mode<synchronous>, transform_indices = @transform_3, window_bounds = array<i64: 128, 128>}, {pipeline_mode = #tpu.pipeline_mode<synchronous>, transform_indices = @transform_4, window_bounds = array<i64: 1, 128>}, {pipeline_mode = #tpu.pipeline_mode<synchronous>, transform_indices = @transform_5, window_bounds = array<i64: 128, 128>}, {pipeline_mode = #tpu.pipeline_mode<synchronous>, transform_indices = @transform_6, window_bounds = array<i64: 1, 128>}, {pipeline_mode = #tpu.pipeline_mode<synchronous>, transform_indices = @transform_7, window_bounds = array<i64: 128, 128>}, {pipeline_mode = #tpu.pipeline_mode<synchronous>, transform_indices = @transform_8, window_bounds = array<i64: 1, 128>}, {pipeline_mode = #tpu.pipeline_mode<synchronous>, transform_indices = @transform_9, window_bounds = array<i64: 16, 128>}]} {
    %c0 = arith.constant 0 : index
    %c0_0 = arith.constant 0 : index
    %0 = vector.load %arg3[%c0, %c0_0] : memref<4x128xf32, #tpu.memory_space<vmem>>, vector<4x128xf32>
    %c0_1 = arith.constant 0 : index
    %c0_2 = arith.constant 0 : index
    %1 = vector.load %arg4[%c0_1, %c0_2] : memref<128x128xbf16, #tpu.memory_space<vmem>>, vector<128x128xbf16>
    %2 = arith.truncf %0 : vector<4x128xf32> to vector<4x128xbf16>
    %cst = arith.constant dense<0.000000e+00> : vector<4x128xf32>
    %3 = tpu.matmul %2, %1, %cst {dimension_numbers = #tpu.dot_dimension_numbers<[1], [0], [0], [1], [0, 0, 1, 1], [], []>} : vector<4x128xbf16>, vector<128x128xbf16>, vector<4x128xf32> -> vector<4x128xf32>
    %c0_3 = arith.constant 0 : index
    %c0_4 = arith.constant 0 : index
    %4 = vector.load %arg5[%c0_3, %c0_4] : memref<1x128xf32, #tpu.memory_space<vmem>>, vector<1x128xf32>
    %5 = vector.broadcast %4 : vector<1x128xf32> to vector<4x128xf32>
    %6 = arith.addf %3, %5 : vector<4x128xf32>
    %cst_5 = arith.constant dense<0.000000e+00> : vector<128xf32>
    %7 = vector.multi_reduction <add>, %6, %cst_5 [0] : vector<4x128xf32> to vector<128xf32>
    %8 = vector.shape_cast %7 : vector<128xf32> to vector<1x128xf32>
    %cst_6 = arith.constant 4.000000e+00 : f32
    %9 = vector.broadcast %cst_6 : f32 to vector<1x128xf32>
    %10 = arith.divf %8, %9 : vector<1x128xf32>
    %c0_7 = arith.constant 0 : index
    %c0_8 = arith.constant 0 : index
    %11 = vector.load %arg2[%c0_7, %c0_8] : memref<8x128xf32, #tpu.memory_space<vmem>>, vector<8x128xf32>
    %cst_9 = arith.constant dense<0.000000e+00> : vector<128xf32>
    %12 = vector.multi_reduction <add>, %11, %cst_9 [0] : vector<8x128xf32> to vector<128xf32>
    %13 = vector.shape_cast %12 : vector<128xf32> to vector<1x128xf32>
    %cst_10 = arith.constant 8.000000e+00 : f32
    %14 = vector.broadcast %cst_10 : f32 to vector<1x128xf32>
    %15 = arith.divf %13, %14 : vector<1x128xf32>
    %c0_11 = arith.constant 0 : index
    %c0_12 = arith.constant 0 : index
    %16 = vector.load %arg1[%c0_11, %c0_12] : memref<16x128xf32, #tpu.memory_space<vmem>>, vector<16x128xf32>
    %17 = vector.broadcast %10 : vector<1x128xf32> to vector<16x128xf32>
    %18 = arith.addf %16, %17 : vector<16x128xf32>
    %19 = vector.broadcast %15 : vector<1x128xf32> to vector<16x128xf32>
    %20 = arith.addf %18, %19 : vector<16x128xf32>
    %c0_13 = arith.constant 0 : index
    %c0_14 = arith.constant 0 : index
    %21 = vector.load %arg6[%c0_13, %c0_14] : memref<128x128xbf16, #tpu.memory_space<vmem>>, vector<128x128xbf16>
    %22 = arith.truncf %20 : vector<16x128xf32> to vector<16x128xbf16>
    %cst_15 = arith.constant dense<0.000000e+00> : vector<16x128xf32>
    %23 = tpu.matmul %22, %21, %cst_15 {dimension_numbers = #tpu.dot_dimension_numbers<[1], [0], [0], [1], [0, 0, 1, 1], [], []>} : vector<16x128xbf16>, vector<128x128xbf16>, vector<16x128xf32> -> vector<16x128xf32>
    %c0_16 = arith.constant 0 : index
    %c0_17 = arith.constant 0 : index
    %24 = vector.load %arg7[%c0_16, %c0_17] : memref<1x128xf32, #tpu.memory_space<vmem>>, vector<1x128xf32>
    %25 = vector.broadcast %24 : vector<1x128xf32> to vector<16x128xf32>
    %26 = arith.addf %23, %25 : vector<16x128xf32>
    %cst_18 = arith.constant 0.000000e+00 : f32
    %27 = vector.broadcast %cst_18 : f32 to vector<16x128xf32>
    %28 = arith.maximumf %26, %27 : vector<16x128xf32>
    %c0_19 = arith.constant 0 : index
    %c0_20 = arith.constant 0 : index
    %29 = vector.load %arg8[%c0_19, %c0_20] : memref<128x128xbf16, #tpu.memory_space<vmem>>, vector<128x128xbf16>
    %30 = arith.truncf %28 : vector<16x128xf32> to vector<16x128xbf16>
    %cst_21 = arith.constant dense<0.000000e+00> : vector<16x128xf32>
    %31 = tpu.matmul %30, %29, %cst_21 {dimension_numbers = #tpu.dot_dimension_numbers<[1], [0], [0], [1], [0, 0, 1, 1], [], []>} : vector<16x128xbf16>, vector<128x128xbf16>, vector<16x128xf32> -> vector<16x128xf32>
    %c0_22 = arith.constant 0 : index
    %c0_23 = arith.constant 0 : index
    %32 = vector.load %arg9[%c0_22, %c0_23] : memref<1x128xf32, #tpu.memory_space<vmem>>, vector<1x128xf32>
    %33 = vector.broadcast %32 : vector<1x128xf32> to vector<16x128xf32>
    %34 = arith.addf %31, %33 : vector<16x128xf32>
    %35 = math.tanh %34 : vector<16x128xf32>
    %c0_24 = arith.constant 0 : index
    %c0_25 = arith.constant 0 : index
    %36 = vector.load %arg10[%c0_24, %c0_25] : memref<16x128xf32, #tpu.memory_space<vmem>>, vector<16x128xf32>
    tpu.vector_store %arg10[%c0_24, %c0_25], %35 {strides = array<i32>} : memref<16x128xf32, #tpu.memory_space<vmem>>, vector<16x128xf32>,
    return
  }
  func.func @transform_0(%arg0: i32) -> (i32, i32) {
    %c0_i32 = arith.constant 0 : i32
    %c0_i32_0 = arith.constant 0 : i32
    %c0_i32_1 = arith.constant 0 : i32
    return %c0_i32, %c0_i32_0 : i32, i32
  }
  func.func @transform_1(%arg0: i32) -> (i32, i32) {
    %c0_i32 = arith.constant 0 : i32
    %c0_i32_0 = arith.constant 0 : i32
    %c0_i32_1 = arith.constant 0 : i32
    return %c0_i32, %c0_i32_0 : i32, i32
  }
  func.func @transform_2(%arg0: i32) -> (i32, i32) {
    %c0_i32 = arith.constant 0 : i32
    %c0_i32_0 = arith.constant 0 : i32
    %c0_i32_1 = arith.constant 0 : i32
    return %c0_i32, %c0_i32_0 : i32, i32
  }
  func.func @transform_3(%arg0: i32) -> (i32, i32) {
    %c0_i32 = arith.constant 0 : i32
    %c0_i32_0 = arith.constant 0 : i32
    %c0_i32_1 = arith.constant 0 : i32
    return %c0_i32, %c0_i32_0 : i32, i32
  }
  func.func @transform_4(%arg0: i32) -> (i32, i32) {
    %c0_i32 = arith.constant 0 : i32
    %c0_i32_0 = arith.constant 0 : i32
    %c0_i32_1 = arith.constant 0 : i32
    return %c0_i32, %c0_i32_0 : i32, i32
  }
  func.func @transform_5(%arg0: i32) -> (i32, i32) {
    %c0_i32 = arith.constant 0 : i32
    %c0_i32_0 = arith.constant 0 : i32
    %c0_i32_1 = arith.constant 0 : i32
    return %c0_i32, %c0_i32_0 : i32, i32
  }
  func.func @transform_6(%arg0: i32) -> (i32, i32) {
    %c0_i32 = arith.constant 0 : i32
    %c0_i32_0 = arith.constant 0 : i32
    %c0_i32_1 = arith.constant 0 : i32
    return %c0_i32, %c0_i32_0 : i32, i32
  }
  func.func @transform_7(%arg0: i32) -> (i32, i32) {
    %c0_i32 = arith.constant 0 : i32
    %c0_i32_0 = arith.constant 0 : i32
    %c0_i32_1 = arith.constant 0 : i32
    return %c0_i32, %c0_i32_0 : i32, i32
  }
  func.func @transform_8(%arg0: i32) -> (i32, i32) {
    %c0_i32 = arith.constant 0 : i32
    %c0_i32_0 = arith.constant 0 : i32
    %c0_i32_1 = arith.constant 0 : i32
    return %c0_i32, %c0_i32_0 : i32, i32
  }
  func.func @transform_9(%arg0: i32) -> (i32, i32) {
    %c0_i32 = arith.constant 0 : i32
    %c0_i32_0 = arith.constant 0 : i32
    %c0_i32_1 = arith.constant 0 : i32
    return %c0_i32, %c0_i32_0 : i32, i32
  }
}

</mosaic_0001>

<llo_original>
// kernel: gpt_sovits_forward.3
$region0: #{gpt_sovits_forward.3}
  #allocation0 [shape = 'u32[]', space=smem, size = 0x4, offset = 0x4, fixed_abs, tag = 'smem constant byte address 0x4 - core index']
  #allocation1 [shape = 'u32[144,128]{1,0:T(1,128)}', space=vmem, size = 0x12000, scoped, tag = 'internal scratch']
  %s0 = inlined_call_operand.vmem [shape: f32[16,128], index: 0, kind: input, shape index: {}]
  %s1 = inlined_call_operand.vmem [shape: f32[8,128], index: 1, kind: input, shape index: {}]
  %s2 = inlined_call_operand.vmem [shape: f32[4,128], index: 2, kind: input, shape index: {}]
  %s3 = inlined_call_operand.vmem [shape: bf16[128,128], index: 3, kind: input, shape index: {}]
  %s4 = inlined_call_operand.vmem [shape: f32[1,128], index: 4, kind: input, shape index: {}]
  %s5 = inlined_call_operand.vmem [shape: bf16[128,128], index: 5, kind: input, shape index: {}]
  %s6 = inlined_call_operand.vmem [shape: f32[1,128], index: 6, kind: input, shape index: {}]
  %s7 = inlined_call_operand.vmem [shape: bf16[128,128], index: 7, kind: input, shape index: {}]
  %s8 = inlined_call_operand.vmem [shape: f32[1,128], index: 8, kind: input, shape index: {}]
  %s9 = inlined_call_operand.hbm [shape: f32[16,128], index: 9, kind: output, shape index: {}]
  %s10 = sld [smem:[#allocation0]]
  $region46: #{gpt_sovits_forward.3} parent=0
    _
  %s12 = ssub.s32 1, %s10
  %s13 = scalar_select 0, %s12, %s10
  $region1: #{gpt_sovits_forward.3} parent=0
    #allocation2 [shape = 'u8[8192]{0}', space=vmem, size = 0x2000, scoped, tag = 'output window, operand 0, single buffered']
    #allocation3 [shape = 's32[1]{0}', space=sflag, size = 0x4, scoped, tag = 'scoped memory for gpt_sovits_forward.3']
    %14 = vsyncpa [#allocation3], 0
    // Predicated region
    $region2: #{gpt_sovits_forward.3} parent=1 // pred_check
      _
    $region3: #{gpt_sovits_forward.3} parent=1 // pred_check_branch
      %16 = sbr.rel (0) target = $region5
    $region4: #{gpt_sovits_forward.3} parent=1 // pred_region
      _
    $region5: #{gpt_sovits_forward.3} parent=1 // pred_fallthru
      _
    // Predicated region
    $region6: #{gpt_sovits_forward.3} parent=1 // pred_check
      _
    $region7: #{gpt_sovits_forward.3} parent=1 // pred_check_branch
      %18 = sbr.rel (0) target = $region9
    $region8: #{gpt_sovits_forward.3} parent=1 // pred_region
      _
    $region9: #{gpt_sovits_forward.3} parent=1 // pred_fallthru
      _
    // Predicated region
    $region10: #{gpt_sovits_forward.3} parent=1 // pred_check
      _
    $region11: #{gpt_sovits_forward.3} parent=1 // pred_check_branch
      %20 = sbr.rel (0) target = $region13
    $region12: #{gpt_sovits_forward.3} parent=1 // pred_region
      _
    $region13: #{gpt_sovits_forward.3} parent=1 // pred_fallthru
      _
    // Predicated region
    $region14: #{gpt_sovits_forward.3} parent=1 // pred_check
      _
    $region15: #{gpt_sovits_forward.3} parent=1 // pred_check_branch
      %22 = sbr.rel (0) target = $region17
    $region16: #{gpt_sovits_forward.3} parent=1 // pred_region
      _
    $region17: #{gpt_sovits_forward.3} parent=1 // pred_fallthru
      _
    // Predicated region
    $region18: #{gpt_sovits_forward.3} parent=1 // pred_check
      _
    $region19: #{gpt_sovits_forward.3} parent=1 // pred_check_branch
      %24 = sbr.rel (0) target = $region21
    $region20: #{gpt_sovits_forward.3} parent=1 // pred_region
      _
    $region21: #{gpt_sovits_forward.3} parent=1 // pred_fallthru
      _
    // Predicated region
    $region22: #{gpt_sovits_forward.3} parent=1 // pred_check
      _
    $region23: #{gpt_sovits_forward.3} parent=1 // pred_check_branch
      %26 = sbr.rel (0) target = $region25
    $region24: #{gpt_sovits_forward.3} parent=1 // pred_region
      _
    $region25: #{gpt_sovits_forward.3} parent=1 // pred_fallthru
      _
    // Predicated region
    $region26: #{gpt_sovits_forward.3} parent=1 // pred_check
      _
    $region27: #{gpt_sovits_forward.3} parent=1 // pred_check_branch
      %28 = sbr.rel (0) target = $region29
    $region28: #{gpt_sovits_forward.3} parent=1 // pred_region
      _
    $region29: #{gpt_sovits_forward.3} parent=1 // pred_fallthru
      _
    // Predicated region
    $region30: #{gpt_sovits_forward.3} parent=1 // pred_check
      _
    $region31: #{gpt_sovits_forward.3} parent=1 // pred_check_branch
      %30 = sbr.rel (0) target = $region33
    $region32: #{gpt_sovits_forward.3} parent=1 // pred_region
      _
    $region33: #{gpt_sovits_forward.3} parent=1 // pred_fallthru
      _
    // Predicated region
    $region34: #{gpt_sovits_forward.3} parent=1 // pred_check
      _
    $region35: #{gpt_sovits_forward.3} parent=1 // pred_check_branch
      %32 = sbr.rel (0) target = $region37
    $region36: #{gpt_sovits_forward.3} parent=1 // pred_region
      _
    $region37: #{gpt_sovits_forward.3} parent=1 // pred_fallthru
      _
    %v34 = vld [vmem:[%s2] sm:$0xf]
    %v35 = vld [vmem:[%s3] sm:$0xf]
    %v36 = vld [vmem:[%s3 + $0x4] sm:$0xf]
    %v37 = vld [vmem:[%s3 + $0x8] sm:$0xf]
    %v38 = vld [vmem:[%s3 + $0xc] sm:$0xf]
    %v39 = vld [vmem:[%s3 + $0x10] sm:$0xf]
    %v40 = vld [vmem:[%s3 + $0x14] sm:$0xf]
    %v41 = vld [vmem:[%s3 + $0x18] sm:$0xf]
    %v42 = vld [vmem:[%s3 + $0x1c] sm:$0xf]
    %v43 = vld [vmem:[%s3 + $0x20] sm:$0xf]
    %v44 = vld [vmem:[%s3 + $0x24] sm:$0xf]
    %v45 = vld [vmem:[%s3 + $0x28] sm:$0xf]
    %v46 = vld [vmem:[%s3 + $0x2c] sm:$0xf]
    %v47 = vld [vmem:[%s3 + $0x30] sm:$0xf]
    %v48 = vld [vmem:[%s3 + $0x34] sm:$0xf]
    %v49 = vld [vmem:[%s3 + $0x38] sm:$0xf]
    %v50 = vld [vmem:[%s3 + $0x3c] sm:$0xf]
    %v51 = vpack.c.bf16 %v34, %v34
    %v52 = vld [vmem:[%s4] sm:$0x1]
    %v54 = vlaneseq
    %v55 = vshrl.u32 %v54, 7
    %v56 = vsub.s32 0, %v55
    %v57 = vrot.slane %v52, %v56
    %v75 = vunpack.c.l.b16 %v35
    %v76 = vunpack.c.l.b16 %v36
    %v77 = vunpack.c.l.b16 %v37
    %v78 = vunpack.c.l.b16 %v38
    %v79 = vunpack.c.l.b16 %v39
    %v80 = vunpack.c.l.b16 %v40
    %v81 = vunpack.c.l.b16 %v41
    %v82 = vunpack.c.l.b16 %v42
    %v83 = vunpack.c.l.b16 %v43
    %v84 = vunpack.c.l.b16 %v44
    %v85 = vunpack.c.l.b16 %v45
    %v86 = vunpack.c.l.b16 %v46
    %v87 = vunpack.c.l.b16 %v47
    %v88 = vunpack.c.l.b16 %v48
    %v89 = vunpack.c.l.b16 %v49
    %v90 = vunpack.c.l.b16 %v50
    %v91 = vpack.c.b16 %v76, %v75
    %v92 = vpack.c.b16 %v78, %v77
    %v93 = vpack.c.b16 %v80, %v79
    %v94 = vpack.c.b16 %v82, %v81
    %v95 = vpack.c.b16 %v84, %v83
    %v96 = vpack.c.b16 %v86, %v85
    %v97 = vpack.c.b16 %v88, %v87
    %v98 = vpack.c.b16 %v90, %v89
    %107 = vmatprep.subr.bf16.mxu0 0
    %108 = vmatpush1.bf16.msra.mxu0 %v91
    %109 = vmatprep.subr.bf16.mxu0 0
    %110 = vmatpush1.bf16.msra.mxu0 %v92
    %111 = vmatprep.subr.bf16.mxu0 0
    %112 = vmatpush1.bf16.msra.mxu0 %v93
    %113 = vmatprep.subr.bf16.mxu0 0
    %114 = vmatpush1.bf16.msra.mxu0 %v94
    %115 = vmatprep.subr.bf16.mxu0 0
    %116 = vmatpush1.bf16.msra.mxu0 %v95
    %117 = vmatprep.subr.bf16.mxu0 0
    %118 = vmatpush1.bf16.msra.mxu0 %v96
    %119 = vmatprep.subr.bf16.mxu0 0
    %120 = vmatpush1.bf16.msra.mxu0 %v97
    %121 = vmatprep.subr.bf16.mxu0 0
    %122 = vmatpush1.bf16.msra.mxu0 %v98
    %123 = vmatprep.subr.bf16.mxu0 0
    %124 = vmatpush1.bf16.msra.mxu0 0
    %125 = vmatprep.subr.bf16.mxu0 0
    %126 = vmatpush1.bf16.msra.mxu0 0
    %127 = vmatprep.subr.bf16.mxu0 0
    %128 = vmatpush1.bf16.msra.mxu0 0
    %129 = vmatprep.subr.bf16.mxu0 0
    %130 = vmatpush1.bf16.msra.mxu0 0
    %131 = vmatprep.subr.bf16.mxu0 0
    %132 = vmatpush1.bf16.msra.mxu0 0
    %133 = vmatprep.subr.bf16.mxu0 0
    %134 = vmatpush1.bf16.msra.mxu0 0
    %135 = vmatprep.subr.bf16.mxu0 0
    %136 = vmatpush1.bf16.msra.mxu0 0
    %137 = vmatprep.subr.bf16.mxu0 0
    %138 = vmatpush1.bf16.msra.mxu0 0
    %139 = vmatprep.mubr.bf16.mxu0 0
    %140 = vmatmul.mubr.bf16.gmra.mrb[0].mxu0 %v51
    %v141 = vpop.f32.mrb[0].mxu0
    %v142 = vadd.f32 %v57, %v141
    %v143 = vpop.f32.mrb[0].mxu0
    %v144 = vpop.f32.mrb[0].mxu0
    %v145 = vpop.f32.mrb[0].mxu0
    %146 = vdwg.mxu0
    %vm147 = vcmask 1043456
    %v148 = vsel %vm147, %v142, 0.0
    %v149 = vrot.slane %v148, 4
    %v150 = vadd.f32 %v148, %v149
    %v151 = vrot.slane %v150, 2
    %v152 = vadd.f32 %v150, %v151
    %v153 = vrot.slane %v152, 1
    %v154 = vadd.f32 %v152, %v153
    %v155 = vrcp.pop 4.0
    %v156 = vmul.f32 %v154, %v155
    %v157 = vld [vmem:[%s1] sm:$0xff]
    %v158 = vrot.slane %v157, 4
    %v159 = vadd.f32 %v157, %v158
    %v160 = vrot.slane %v159, 2
    %v161 = vadd.f32 %v159, %v160
    %v162 = vrot.slane %v161, 1
    %v163 = vadd.f32 %v161, %v162
    %v164 = vrcp.pop 8.0
    %v165 = vmul.f32 %v163, %v164
    %v166 = vld [vmem:[%s0] sm:$0xff]
    %v167 = vld [vmem:[%s0 + $0x8] sm:$0xff]
    %v168 = vadd.f32 %v166, %v156
    %v169 = vadd.f32 %v167, %v156
    %v170 = vadd.f32 %v168, %v165
    %v171 = vadd.f32 %v169, %v165
    %v172 = vld [vmem:[%s5] sm:$0xf]
    %v173 = vld [vmem:[%s5 + $0x4] sm:$0xf]
    %v174 = vld [vmem:[%s5 + $0x8] sm:$0xf]
    %v175 = vld [vmem:[%s5 + $0xc] sm:$0xf]
    %v176 = vld [vmem:[%s5 + $0x10] sm:$0xf]
    %v177 = vld [vmem:[%s5 + $0x14] sm:$0xf]
    %v178 = vld [vmem:[%s5 + $0x18] sm:$0xf]
    %v179 = vld [vmem:[%s5 + $0x1c] sm:$0xf]
    %v180 = vld [vmem:[%s5 + $0x20] sm:$0xf]
    %v181 = vld [vmem:[%s5 + $0x24] sm:$0xf]
    %v182 = vld [vmem:[%s5 + $0x28] sm:$0xf]
    %v183 = vld [vmem:[%s5 + $0x2c] sm:$0xf]
    %v184 = vld [vmem:[%s5 + $0x30] sm:$0xf]
    %v185 = vld [vmem:[%s5 + $0x34] sm:$0xf]
    %v186 = vld [vmem:[%s5 + $0x38] sm:$0xf]
    %v187 = vld [vmem:[%s5 + $0x3c] sm:$0xf]
    %v188 = vpack.c.bf16 %v171, %v170
    %v189 = vld [vmem:[%s6] sm:$0x1]
    %v191 = vlaneseq
    %v192 = vshrl.u32 %v191, 7
    %v193 = vsub.s32 0, %v192
    %v194 = vrot.slane %v189, %v193
    %v212 = vunpack.c.l.b16 %v172
    %v213 = vunpack.c.l.b16 %v173
    %v214 = vunpack.c.l.b16 %v174
    %v215 = vunpack.c.l.b16 %v175
    %v216 = vunpack.c.l.b16 %v176
    %v217 = vunpack.c.l.b16 %v177
    %v218 = vunpack.c.l.b16 %v178
    %v219 = vunpack.c.l.b16 %v179
    %v220 = vunpack.c.l.b16 %v180
    %v221 = vunpack.c.l.b16 %v181
    %v222 = vunpack.c.l.b16 %v182
    %v223 = vunpack.c.l.b16 %v183
    %v224 = vunpack.c.l.b16 %v184
    %v225 = vunpack.c.l.b16 %v185
    %v226 = vunpack.c.l.b16 %v186
    %v227 = vunpack.c.l.b16 %v187
    %v228 = vpack.c.b16 %v213, %v212
    %v229 = vpack.c.b16 %v215, %v214
    %v230 = vpack.c.b16 %v217, %v216
    %v231 = vpack.c.b16 %v219, %v218
    %v232 = vpack.c.b16 %v221, %v220
    %v233 = vpack.c.b16 %v223, %v222
    %v234 = vpack.c.b16 %v225, %v224
    %v235 = vpack.c.b16 %v227, %v226
    %244 = vmatprep.subr.bf16.mxu0 0
    %245 = vmatpush1.bf16.msra.mxu0 %v228
    %246 = vmatprep.subr.bf16.mxu0 0
    %247 = vmatpush1.bf16.msra.mxu0 %v229
    %248 = vmatprep.subr.bf16.mxu0 0
    %249 = vmatpush1.bf16.msra.mxu0 %v230
    %250 = vmatprep.subr.bf16.mxu0 0
    %251 = vmatpush1.bf16.msra.mxu0 %v231
    %252 = vmatprep.subr.bf16.mxu0 0
    %253 = vmatpush1.bf16.msra.mxu0 %v232
    %254 = vmatprep.subr.bf16.mxu0 0
    %255 = vmatpush1.bf16.msra.mxu0 %v233
    %256 = vmatprep.subr.bf16.mxu0 0
    %257 = vmatpush1.bf16.msra.mxu0 %v234
    %258 = vmatprep.subr.bf16.mxu0 0
    %259 = vmatpush1.bf16.msra.mxu0 %v235
    %260 = vmatprep.subr.bf16.mxu0 0
    %261 = vmatpush1.bf16.msra.mxu0 0
    %262 = vmatprep.subr.bf16.mxu0 0
    %263 = vmatpush1.bf16.msra.mxu0 0
    %264 = vmatprep.subr.bf16.mxu0 0
    %265 = vmatpush1.bf16.msra.mxu0 0
    %266 = vmatprep.subr.bf16.mxu0 0
    %267 = vmatpush1.bf16.msra.mxu0 0
    %268 = vmatprep.subr.bf16.mxu0 0
    %269 = vmatpush1.bf16.msra.mxu0 0
    %270 = vmatprep.subr.bf16.mxu0 0
    %271 = vmatpush1.bf16.msra.mxu0 0
    %272 = vmatprep.subr.bf16.mxu0 0
    %273 = vmatpush1.bf16.msra.mxu0 0
    %274 = vmatprep.subr.bf16.mxu0 0
    %275 = vmatpush1.bf16.msra.mxu0 0
    %276 = vmatprep.mubr.bf16.mxu0 0
    %277 = vmatmul.mubr.bf16.gmra.mrb[0].mxu0 %v188
    %v278 = vpop.f32.mrb[0].mxu0
    %v279 = vadd.f32 %v194, %v278
    %v280 = vpop.f32.mrb[0].mxu0
    %v281 = vpop.f32.mrb[0].mxu0
    %v282 = vadd.f32 %v194, %v281
    %v283 = vpop.f32.mrb[0].mxu0
    %284 = vdwg.mxu0
    %v285 = vmax.f32 %v279, 0.0
    %v286 = vmax.f32 %v282, 0.0
    %v287 = vld [vmem:[%s7] sm:$0xf]
    %v288 = vld [vmem:[%s7 + $0x4] sm:$0xf]
    %v289 = vld [vmem:[%s7 + $0x8] sm:$0xf]
    %v290 = vld [vmem:[%s7 + $0xc] sm:$0xf]
    %v291 = vld [vmem:[%s7 + $0x10] sm:$0xf]
    %v292 = vld [vmem:[%s7 + $0x14] sm:$0xf]
    %v293 = vld [vmem:[%s7 + $0x18] sm:$0xf]
    %v294 = vld [vmem:[%s7 + $0x1c] sm:$0xf]
    %v295 = vld [vmem:[%s7 + $0x20] sm:$0xf]
    %v296 = vld [vmem:[%s7 + $0x24] sm:$0xf]
    %v297 = vld [vmem:[%s7 + $0x28] sm:$0xf]
    %v298 = vld [vmem:[%s7 + $0x2c] sm:$0xf]
    %v299 = vld [vmem:[%s7 + $0x30] sm:$0xf]
    %v300 = vld [vmem:[%s7 + $0x34] sm:$0xf]
    %v301 = vld [vmem:[%s7 + $0x38] sm:$0xf]
    %v302 = vld [vmem:[%s7 + $0x3c] sm:$0xf]
    %v303 = vpack.c.bf16 %v286, %v285
    %v304 = vld [vmem:[%s8] sm:$0x1]
    %v306 = vlaneseq
    %v307 = vshrl.u32 %v306, 7
    %v308 = vsub.s32 0, %v307
    %v309 = vrot.slane %v304, %v308
    %v327 = vunpack.c.l.b16 %v287
    %v328 = vunpack.c.l.b16 %v288
    %v329 = vunpack.c.l.b16 %v289
    %v330 = vunpack.c.l.b16 %v290
    %v331 = vunpack.c.l.b16 %v291
    %v332 = vunpack.c.l.b16 %v292
    %v333 = vunpack.c.l.b16 %v293
    %v334 = vunpack.c.l.b16 %v294
    %v335 = vunpack.c.l.b16 %v295
    %v336 = vunpack.c.l.b16 %v296
    %v337 = vunpack.c.l.b16 %v297
    %v338 = vunpack.c.l.b16 %v298
    %v339 = vunpack.c.l.b16 %v299
    %v340 = vunpack.c.l.b16 %v300
    %v341 = vunpack.c.l.b16 %v301
    %v342 = vunpack.c.l.b16 %v302
    %v343 = vpack.c.b16 %v328, %v327
    %v344 = vpack.c.b16 %v330, %v329
    %v345 = vpack.c.b16 %v332, %v331
    %v346 = vpack.c.b16 %v334, %v333
    %v347 = vpack.c.b16 %v336, %v335
    %v348 = vpack.c.b16 %v338, %v337
    %v349 = vpack.c.b16 %v340, %v339
    %v350 = vpack.c.b16 %v342, %v341
    %359 = vmatprep.subr.bf16.mxu0 0
    %360 = vmatpush1.bf16.msra.mxu0 %v343
    %361 = vmatprep.subr.bf16.mxu0 0
    %362 = vmatpush1.bf16.msra.mxu0 %v344
    %363 = vmatprep.subr.bf16.mxu0 0
    %364 = vmatpush1.bf16.msra.mxu0 %v345
    %365 = vmatprep.subr.bf16.mxu0 0
    %366 = vmatpush1.bf16.msra.mxu0 %v346
    %367 = vmatprep.subr.bf16.mxu0 0
    %368 = vmatpush1.bf16.msra.mxu0 %v347
    %369 = vmatprep.subr.bf16.mxu0 0
    %370 = vmatpush1.bf16.msra.mxu0 %v348
    %371 = vmatprep.subr.bf16.mxu0 0
    %372 = vmatpush1.bf16.msra.mxu0 %v349
    %373 = vmatprep.subr.bf16.mxu0 0
    %374 = vmatpush1.bf16.msra.mxu0 %v350
    %375 = vmatprep.subr.bf16.mxu0 0
    %376 = vmatpush1.bf16.msra.mxu0 0
    %377 = vmatprep.subr.bf16.mxu0 0
    %378 = vmatpush1.bf16.msra.mxu0 0
    %379 = vmatprep.subr.bf16.mxu0 0
    %380 = vmatpush1.bf16.msra.mxu0 0
    %381 = vmatprep.subr.bf16.mxu0 0
    %382 = vmatpush1.bf16.msra.mxu0 0
    %383 = vmatprep.subr.bf16.mxu0 0
    %384 = vmatpush1.bf16.msra.mxu0 0
    %385 = vmatprep.subr.bf16.mxu0 0
    %386 = vmatpush1.bf16.msra.mxu0 0
    %387 = vmatprep.subr.bf16.mxu0 0
    %388 = vmatpush1.bf16.msra.mxu0 0
    %389 = vmatprep.subr.bf16.mxu0 0
    %390 = vmatpush1.bf16.msra.mxu0 0
    %391 = vmatprep.mubr.bf16.mxu0 0
    %392 = vmatmul.mubr.bf16.gmra.mrb[0].mxu0 %v303
    %v393 = vpop.f32.mrb[0].mxu0
    %v394 = vadd.f32 %v309, %v393
    %v395 = vpop.f32.mrb[0].mxu0
    %v396 = vpop.f32.mrb[0].mxu0
    %v397 = vadd.f32 %v309, %v396
    %v398 = vpop.f32.mrb[0].mxu0
    %399 = vdwg.mxu0
    %v400 = vtanh.pop %v394
    %v401 = vtanh.pop %v397
    %402 = vst [vmem:[#allocation2] sm:$0xff] %v400
    %403 = vst [vmem:[#allocation2 + $0x8] sm:$0xff] %v401
    // Predicated region
    $region38: #{gpt_sovits_forward.3} parent=1 // pred_check
      _
    $region39: #{gpt_sovits_forward.3} parent=1 // pred_check_branch
      %405 = sbr.rel (0) target = $region41
    $region40: #{gpt_sovits_forward.3} parent=1 // pred_region
      %s407 = ssub.s32 256, 256
      %408 = vsyncadd [#allocation3], %s407
      %s409 = sshll.u32 [#allocation2], 4
      %s410 = int_to_ptr.vmem [resolvable:$true] %s409
      %415 = dma.vmem_to_hbm [thread:$0]  %s410, 256, %s9, [#allocation3], 128, 128, 8
    $region41: #{gpt_sovits_forward.3} parent=1 // pred_fallthru
      _
    // Predicated region
    $region42: #{gpt_sovits_forward.3} parent=1 // pred_check
      _
    $region43: #{gpt_sovits_forward.3} parent=1 // pred_check_branch
      %417 = sbr.rel (0) target = $region45
    $region44: #{gpt_sovits_forward.3} parent=1 // pred_region
      %418 = dma.done [#allocation3], 256
    $region45: #{gpt_sovits_forward.3} parent=1 // pred_fallthru
      _
    %419 = vsyncpa [#allocation3], 1

// kernel: gpt_sovits_forward.2
$region0: #{gpt_sovits_forward.2}
  #allocation0 [shape = 'u32[]', space=smem, size = 0x4, offset = 0x4, fixed_abs, tag = 'smem constant byte address 0x4 - core index']
  #allocation1 [shape = 'u32[144,128]{1,0:T(1,128)}', space=vmem, size = 0x12000, scoped, tag = 'internal scratch']
  %s0 = inlined_call_operand.vmem [shape: f32[16,128], index: 0, kind: input, shape index: {}]
  %s1 = inlined_call_operand.vmem [shape: f32[128,16], index: 1, kind: input, shape index: {}]
  %s2 = inlined_call_operand.vmem [shape: f32[128,16], index: 2, kind: input, shape index: {}]
  %s3 = inlined_call_operand.vmem [shape: bf16[128,128], index: 3, kind: input, shape index: {}]
  %s4 = inlined_call_operand.vmem [shape: f32[1,128], index: 4, kind: input, shape index: {}]
  %s5 = inlined_call_operand.vmem [shape: bf16[128,128], index: 5, kind: input, shape index: {}]
  %s6 = inlined_call_operand.vmem [shape: f32[1,128], index: 6, kind: input, shape index: {}]
  %s7 = inlined_call_operand.vmem [shape: bf16[128,128], index: 7, kind: input, shape index: {}]
  %s8 = inlined_call_operand.vmem [shape: f32[1,128], index: 8, kind: input, shape index: {}]
  %s9 = inlined_call_operand.vmem [shape: bf16[128,256], index: 9, kind: input, shape index: {}]
  %s10 = inlined_call_operand.vmem [shape: f32[1,256], index: 10, kind: input, shape index: {}]
  %s11 = inlined_call_operand.vmem [shape: bf16[128,128], index: 11, kind: input, shape index: {}]
  %s12 = inlined_call_operand.vmem [shape: f32[1,128], index: 12, kind: input, shape index: {}]
  %s13 = inlined_call_operand.vmem [shape: bf16[128,128], index: 13, kind: input, shape index: {}]
  %s14 = inlined_call_operand.vmem [shape: f32[1,128], index: 14, kind: input, shape index: {}]
  %s15 = inlined_call_operand.vmem [shape: bf16[128,128], index: 15, kind: input, shape index: {}]
  %s16 = inlined_call_operand.vmem [shape: f32[1,128], index: 16, kind: input, shape index: {}]
  %s17 = inlined_call_operand.vmem [shape: s32[16,1], index: 17, kind: output, shape index: {}]
  %s18 = sld [smem:[#allocation0]]
  $region78: #{gpt_sovits_forward.2} parent=0
    _
  %s20 = ssub.s32 1, %s18
  %s21 = scalar_select 0, %s20, %s18
  // Predicated region
  $region2: #{gpt_sovits_forward.2} parent=0 // pred_check
    _
  $region3: #{gpt_sovits_forward.2} parent=0 // pred_check_branch
    %23 = sbr.rel (0) target = $region5
  $region4: #{gpt_sovits_forward.2} parent=0 // pred_region
    _
  $region5: #{gpt_sovits_forward.2} parent=0 // pred_fallthru
    _
  // Predicated region
  $region6: #{gpt_sovits_forward.2} parent=0 // pred_check
    _
  $region7: #{gpt_sovits_forward.2} parent=0 // pred_check_branch
    %25 = sbr.rel (0) target = $region9
  $region8: #{gpt_sovits_forward.2} parent=0 // pred_region
    _
  $region9: #{gpt_sovits_forward.2} parent=0 // pred_fallthru
    _
  // Predicated region
  $region10: #{gpt_sovits_forward.2} parent=0 // pred_check
    _
  $region11: #{gpt_sovits_forward.2} parent=0 // pred_check_branch
    %27 = sbr.rel (0) target = $region13
  $region12: #{gpt_sovits_forward.2} parent=0 // pred_region
    _
  $region13: #{gpt_sovits_forward.2} parent=0 // pred_fallthru
    _
  // Predicated region
  $region14: #{gpt_sovits_forward.2} parent=0 // pred_check
    _
  $region15: #{gpt_sovits_forward.2} parent=0 // pred_check_branch
    %29 = sbr.rel (0) target = $region17
  $region16: #{gpt_sovits_forward.2} parent=0 // pred_region
    _
  $region17: #{gpt_sovits_forward.2} parent=0 // pred_fallthru
    _
  // Predicated region
  $region18: #{gpt_sovits_forward.2} parent=0 // pred_check
    _
  $region19: #{gpt_sovits_forward.2} parent=0 // pred_check_branch
    %31 = sbr.rel (0) target = $region21
  $region20: #{gpt_sovits_forward.2} parent=0 // pred_region
    _
  $region21: #{gpt_sovits_forward.2} parent=0 // pred_fallthru
    _
  // Predicated region
  $region22: #{gpt_sovits_forward.2} parent=0 // pred_check
    _
  $region23: #{gpt_sovits_forward.2} parent=0 // pred_check_branch
    %33 = sbr.rel (0) target = $region25
  $region24: #{gpt_sovits_forward.2} parent=0 // pred_region
    _
  $region25: #{gpt_sovits_forward.2} parent=0 // pred_fallthru
    _
  // Predicated region
  $region26: #{gpt_sovits_forward.2} parent=0 // pred_check
    _
  $region27: #{gpt_sovits_forward.2} parent=0 // pred_check_branch
    %35 = sbr.rel (0) target = $region29
  $region28: #{gpt_sovits_forward.2} parent=0 // pred_region
    _
  $region29: #{gpt_sovits_forward.2} parent=0 // pred_fallthru
    _
  // Predicated region
  $region30: #{gpt_sovits_forward.2} parent=0 // pred_check
    _
  $region31: #{gpt_sovits_forward.2} parent=0 // pred_check_branch
    %37 = sbr.rel (0) target = $region33
  $region32: #{gpt_sovits_forward.2} parent=0 // pred_region
    _
  $region33: #{gpt_sovits_forward.2} parent=0 // pred_fallthru
    _
  // Predicated region
  $region34: #{gpt_sovits_forward.2} parent=0 // pred_check
    _
  $region35: #{gpt_sovits_forward.2} parent=0 // pred_check_branch
    %39 = sbr.rel (0) target = $region37
  $region36: #{gpt_sovits_forward.2} parent=0 // pred_region
    _
  $region37: #{gpt_sovits_forward.2} parent=0 // pred_fallthru
    _
  // Predicated region
  $region38: #{gpt_sovits_forward.2} parent=0 // pred_check
    _
  $region39: #{gpt_sovits_forward.2} parent=0 // pred_check_branch
    %41 = sbr.rel (0) target = $region41
  $region40: #{gpt_sovits_forward.2} parent=0 // pred_region
    _
  $region41: #{gpt_sovits_forward.2} parent=0 // pred_fallthru
    _
  // Predicated region
  $region42: #{gpt_sovits_forward.2} parent=0 // pred_check
    _
  $region43: #{gpt_sovits_forward.2} parent=0 // pred_check_branch
    %43 = sbr.rel (0) target = $region45
  $region44: #{gpt_sovits_forward.2} parent=0 // pred_region
    _
  $region45: #{gpt_sovits_forward.2} parent=0 // pred_fallthru
    _
  // Predicated region
  $region46: #{gpt_sovits_forward.2} parent=0 // pred_check
    _
  $region47: #{gpt_sovits_forward.2} parent=0 // pred_check_branch
    %45 = sbr.rel (0) target = $region49
  $region48: #{gpt_sovits_forward.2} parent=0 // pred_region
    _
  $region49: #{gpt_sovits_forward.2} parent=0 // pred_fallthru
    _
  // Predicated region
  $region50: #{gpt_sovits_forward.2} parent=0 // pred_check
    _
  $region51: #{gpt_sovits_forward.2} parent=0 // pred_check_branch
    %47 = sbr.rel (0) target = $region53
  $region52: #{gpt_sovits_forward.2} parent=0 // pred_region
    _
  $region53: #{gpt_sovits_forward.2} parent=0 // pred_fallthru
    _
  // Predicated region
  $region54: #{gpt_sovits_forward.2} parent=0 // pred_check
    _
  $region55: #{gpt_sovits_forward.2} parent=0 // pred_check_branch
    %49 = sbr.rel (0) target = $region57
  $region56: #{gpt_sovits_forward.2} parent=0 // pred_region
    _
  $region57: #{gpt_sovits_forward.2} parent=0 // pred_fallthru
    _
  // Predicated region
  $region58: #{gpt_sovits_forward.2} parent=0 // pred_check
    _
  $region59: #{gpt_sovits_forward.2} parent=0 // pred_check_branch
    %51 = sbr.rel (0) target = $region61
  $region60: #{gpt_sovits_forward.2} parent=0 // pred_region
    _
  $region61: #{gpt_sovits_forward.2} parent=0 // pred_fallthru
    _
  // Predicated region
  $region62: #{gpt_sovits_forward.2} parent=0 // pred_check
    _
  $region63: #{gpt_sovits_forward.2} parent=0 // pred_check_branch
    %53 = sbr.rel (0) target = $region65
  $region64: #{gpt_sovits_forward.2} parent=0 // pred_region
    _
  $region65: #{gpt_sovits_forward.2} parent=0 // pred_fallthru
    _
  // Predicated region
  $region66: #{gpt_sovits_forward.2} parent=0 // pred_check
    _
  $region67: #{gpt_sovits_forward.2} parent=0 // pred_check_branch
    %55 = sbr.rel (0) target = $region69
  $region68: #{gpt_sovits_forward.2} parent=0 // pred_region
    _
  $region69: #{gpt_sovits_forward.2} parent=0 // pred_fallthru
    _
  %v57 = vld [vmem:[%s0] sm:$0xff]
  %v58 = vld [vmem:[%s0 + $0x8] sm:$0xff]
  %v59 = vld [vmem:[%s1] sm:$0xff]
  %v60 = vld [vmem:[%s1 + $0x8] sm:$0xff]
  %v61 = vld [vmem:[%s1 + $0x10] sm:$0xff]
  %v62 = vld [vmem:[%s1 + $0x18] sm:$0xff]
  %v63 = vld [vmem:[%s1 + $0x20] sm:$0xff]
  %v64 = vld [vmem:[%s1 + $0x28] sm:$0xff]
  %v65 = vld [vmem:[%s1 + $0x30] sm:$0xff]
  %v66 = vld [vmem:[%s1 + $0x38] sm:$0xff]
  %v67 = vld [vmem:[%s1 + $0x40] sm:$0xff]
  %v68 = vld [vmem:[%s1 + $0x48] sm:$0xff]
  %v69 = vld [vmem:[%s1 + $0x50] sm:$0xff]
  %v70 = vld [vmem:[%s1 + $0x58] sm:$0xff]
  %v71 = vld [vmem:[%s1 + $0x60] sm:$0xff]
  %v72 = vld [vmem:[%s1 + $0x68] sm:$0xff]
  %v73 = vld [vmem:[%s1 + $0x70] sm:$0xff]
  %v74 = vld [vmem:[%s1 + $0x78] sm:$0xff]
  %v75 = vld [vmem:[%s3] sm:$0xf]
  %v76 = vld [vmem:[%s3 + $0x4] sm:$0xf]
  %v77 = vld [vmem:[%s3 + $0x8] sm:$0xf]
  %v78 = vld [vmem:[%s3 + $0xc] sm:$0xf]
  %v79 = vld [vmem:[%s3 + $0x10] sm:$0xf]
  %v80 = vld [vmem:[%s3 + $0x14] sm:$0xf]
  %v81 = vld [vmem:[%s3 + $0x18] sm:$0xf]
  %v82 = vld [vmem:[%s3 + $0x1c] sm:$0xf]
  %v83 = vld [vmem:[%s3 + $0x20] sm:$0xf]
  %v84 = vld [vmem:[%s3 + $0x24] sm:$0xf]
  %v85 = vld [vmem:[%s3 + $0x28] sm:$0xf]
  %v86 = vld [vmem:[%s3 + $0x2c] sm:$0xf]
  %v87 = vld [vmem:[%s3 + $0x30] sm:$0xf]
  %v88 = vld [vmem:[%s3 + $0x34] sm:$0xf]
  %v89 = vld [vmem:[%s3 + $0x38] sm:$0xf]
  %v90 = vld [vmem:[%s3 + $0x3c] sm:$0xf]
  %v91 = vpack.c.bf16 %v60, %v59
  %v92 = vpack.c.bf16 %v62, %v61
  %v93 = vpack.c.bf16 %v64, %v63
  %v94 = vpack.c.bf16 %v66, %v65
  %v95 = vpack.c.bf16 %v68, %v67
  %v96 = vpack.c.bf16 %v70, %v69
  %v97 = vpack.c.bf16 %v72, %v71
  %v98 = vpack.c.bf16 %v74, %v73
  %99 = vxpose.xlu0.c.b16.start [1/8] %v91, 128
  %100 = vxpose.xlu0.c.b16.cont [2/8] %v92, 128
  %101 = vxpose.xlu0.c.b16.cont [3/8] %v93, 128
  %102 = vxpose.xlu0.c.b16.cont [4/8] %v94, 128
  %103 = vxpose.xlu0.c.b16.cont [5/8] %v95, 128
  %104 = vxpose.xlu0.c.b16.cont [6/8] %v96, 128
  %105 = vxpose.xlu0.c.b16.cont [7/8] %v97, 128
  %106 = vxpose.xlu0.c.b16.end [8/8] %v98, 128
  %v107 = vpop.trf.xlu0
  %v108 = vpop.trf.xlu0
  %v109 = vpop.trf.xlu0
  %v110 = vpop.trf.xlu0
  %v111 = vpop.trf.xlu0
  %v112 = vpop.trf.xlu0
  %v113 = vpop.trf.xlu0
  %v114 = vpop.trf.xlu0
  %v131 = vunpack.c.l.b16 %v75
  %v132 = vunpack.c.l.b16 %v76
  %v133 = vunpack.c.l.b16 %v77
  %v134 = vunpack.c.l.b16 %v78
  %v135 = vunpack.c.l.b16 %v79
  %v136 = vunpack.c.l.b16 %v80
  %v137 = vunpack.c.l.b16 %v81
  %v138 = vunpack.c.l.b16 %v82
  %v139 = vunpack.c.l.b16 %v83
  %v140 = vunpack.c.l.b16 %v84
  %v141 = vunpack.c.l.b16 %v85
  %v142 = vunpack.c.l.b16 %v86
  %v143 = vunpack.c.l.b16 %v87
  %v144 = vunpack.c.l.b16 %v88
  %v145 = vunpack.c.l.b16 %v89
  %v146 = vunpack.c.l.b16 %v90
  %v147 = vpack.c.b16 %v132, %v131
  %v148 = vpack.c.b16 %v134, %v133
  %v149 = vpack.c.b16 %v136, %v135
  %v150 = vpack.c.b16 %v138, %v137
  %v151 = vpack.c.b16 %v140, %v139
  %v152 = vpack.c.b16 %v142, %v141
  %v153 = vpack.c.b16 %v144, %v143
  %v154 = vpack.c.b16 %v146, %v145
  %163 = vmatprep.subr.bf16.mxu0 0
  %164 = vmatpush1.bf16.msra.mxu0 %v147
  %165 = vmatprep.subr.bf16.mxu0 0
  %166 = vmatpush1.bf16.msra.mxu0 %v148
  %167 = vmatprep.subr.bf16.mxu0 0
  %168 = vmatpush1.bf16.msra.mxu0 %v149
  %169 = vmatprep.subr.bf16.mxu0 0
  %170 = vmatpush1.bf16.msra.mxu0 %v150
  %171 = vmatprep.subr.bf16.mxu0 0
  %172 = vmatpush1.bf16.msra.mxu0 %v151
  %173 = vmatprep.subr.bf16.mxu0 0
  %174 = vmatpush1.bf16.msra.mxu0 %v152
  %175 = vmatprep.subr.bf16.mxu0 0
  %176 = vmatpush1.bf16.msra.mxu0 %v153
  %177 = vmatprep.subr.bf16.mxu0 0
  %178 = vmatpush1.bf16.msra.mxu0 %v154
  %179 = vmatprep.subr.bf16.mxu0 0
  %180 = vmatpush1.bf16.msra.mxu0 0
  %181 = vmatprep.subr.bf16.mxu0 0
  %182 = vmatpush1.bf16.msra.mxu0 0
  %183 = vmatprep.subr.bf16.mxu0 0
  %184 = vmatpush1.bf16.msra.mxu0 0
  %185 = vmatprep.subr.bf16.mxu0 0
  %186 = vmatpush1.bf16.msra.mxu0 0
  %187 = vmatprep.subr.bf16.mxu0 0
  %188 = vmatpush1.bf16.msra.mxu0 0
  %189 = vmatprep.subr.bf16.mxu0 0
  %190 = vmatpush1.bf16.msra.mxu0 0
  %191 = vmatprep.subr.bf16.mxu0 0
  %192 = vmatpush1.bf16.msra.mxu0 0
  %193 = vmatprep.subr.bf16.mxu0 0
  %194 = vmatpush1.bf16.msra.mxu0 0
  %195 = vmatprep.mubr.bf16.mxu0 0
  %196 = vmatmul.mubr.bf16.gmra.mrb[0].mxu0 %v107
  %v197 = vpop.f32.mrb[0].mxu0
  %v198 = vadd.f32 0.0, %v197
  %v199 = vpop.f32.mrb[0].mxu0
  %v200 = vpop.f32.mrb[0].mxu0
  %v201 = vadd.f32 0.0, %v200
  %v202 = vpop.f32.mrb[0].mxu0
  %203 = vdwg.mxu0
  %v204 = vadd.f32 %v57, %v198
  %v205 = vadd.f32 %v58, %v201
  %v206 = vld [vmem:[%s4] sm:$0x1]
  %v208 = vlaneseq
  %v209 = vshrl.u32 %v208, 7
  %v210 = vsub.s32 0, %v209
  %v211 = vrot.slane %v206, %v210
  %v213 = vadd.f32 %v204, %v211
  %v214 = vadd.f32 %v205, %v211
  %v215 = vld [vmem:[%s2] sm:$0xff]
  %v216 = vld [vmem:[%s2 + $0x8] sm:$0xff]
  %v217 = vld [vmem:[%s2 + $0x10] sm:$0xff]
  %v218 = vld [vmem:[%s2 + $0x18] sm:$0xff]
  %v219 = vld [vmem:[%s2 + $0x20] sm:$0xff]
  %v220 = vld [vmem:[%s2 + $0x28] sm:$0xff]
  %v221 = vld [vmem:[%s2 + $0x30] sm:$0xff]
  %v222 = vld [vmem:[%s2 + $0x38] sm:$0xff]
  %v223 = vld [vmem:[%s2 + $0x40] sm:$0xff]
  %v224 = vld [vmem:[%s2 + $0x48] sm:$0xff]
  %v225 = vld [vmem:[%s2 + $0x50] sm:$0xff]
  %v226 = vld [vmem:[%s2 + $0x58] sm:$0xff]
  %v227 = vld [vmem:[%s2 + $0x60] sm:$0xff]
  %v228 = vld [vmem:[%s2 + $0x68] sm:$0xff]
  %v229 = vld [vmem:[%s2 + $0x70] sm:$0xff]
  %v230 = vld [vmem:[%s2 + $0x78] sm:$0xff]
  %v231 = vld [vmem:[%s5] sm:$0xf]
  %v232 = vld [vmem:[%s5 + $0x4] sm:$0xf]
  %v233 = vld [vmem:[%s5 + $0x8] sm:$0xf]
  %v234 = vld [vmem:[%s5 + $0xc] sm:$0xf]
  %v235 = vld [vmem:[%s5 + $0x10] sm:$0xf]
  %v236 = vld [vmem:[%s5 + $0x14] sm:$0xf]
  %v237 = vld [vmem:[%s5 + $0x18] sm:$0xf]
  %v238 = vld [vmem:[%s5 + $0x1c] sm:$0xf]
  %v239 = vld [vmem:[%s5 + $0x20] sm:$0xf]
  %v240 = vld [vmem:[%s5 + $0x24] sm:$0xf]
  %v241 = vld [vmem:[%s5 + $0x28] sm:$0xf]
  %v242 = vld [vmem:[%s5 + $0x2c] sm:$0xf]
  %v243 = vld [vmem:[%s5 + $0x30] sm:$0xf]
  %v244 = vld [vmem:[%s5 + $0x34] sm:$0xf]
  %v245 = vld [vmem:[%s5 + $0x38] sm:$0xf]
  %v246 = vld [vmem:[%s5 + $0x3c] sm:$0xf]
  %v247 = vpack.c.bf16 %v216, %v215
  %v248 = vpack.c.bf16 %v218, %v217
  %v249 = vpack.c.bf16 %v220, %v219
  %v250 = vpack.c.bf16 %v222, %v221
  %v251 = vpack.c.bf16 %v224, %v223
  %v252 = vpack.c.bf16 %v226, %v225
  %v253 = vpack.c.bf16 %v228, %v227
  %v254 = vpack.c.bf16 %v230, %v229
  %v255 = vld [vmem:[%s6] sm:$0x1]
  %v257 = vlaneseq
  %v258 = vshrl.u32 %v257, 7
  %v259 = vsub.s32 0, %v258
  %v260 = vrot.slane %v255, %v259
  %262 = vxpose.xlu0.c.b16.start [1/8] %v247, 128
  %263 = vxpose.xlu0.c.b16.cont [2/8] %v248, 128
  %264 = vxpose.xlu0.c.b16.cont [3/8] %v249, 128
  %265 = vxpose.xlu0.c.b16.cont [4/8] %v250, 128
  %266 = vxpose.xlu0.c.b16.cont [5/8] %v251, 128
  %267 = vxpose.xlu0.c.b16.cont [6/8] %v252, 128
  %268 = vxpose.xlu0.c.b16.cont [7/8] %v253, 128
  %269 = vxpose.xlu0.c.b16.end [8/8] %v254, 128
  %v270 = vpop.trf.xlu0
  %v271 = vpop.trf.xlu0
  %v272 = vpop.trf.xlu0
  %v273 = vpop.trf.xlu0
  %v274 = vpop.trf.xlu0
  %v275 = vpop.trf.xlu0
  %v276 = vpop.trf.xlu0
  %v277 = vpop.trf.xlu0
  %v294 = vunpack.c.l.b16 %v231
  %v295 = vunpack.c.l.b16 %v232
  %v296 = vunpack.c.l.b16 %v233
  %v297 = vunpack.c.l.b16 %v234
  %v298 = vunpack.c.l.b16 %v235
  %v299 = vunpack.c.l.b16 %v236
  %v300 = vunpack.c.l.b16 %v237
  %v301 = vunpack.c.l.b16 %v238
  %v302 = vunpack.c.l.b16 %v239
  %v303 = vunpack.c.l.b16 %v240
  %v304 = vunpack.c.l.b16 %v241
  %v305 = vunpack.c.l.b16 %v242
  %v306 = vunpack.c.l.b16 %v243
  %v307 = vunpack.c.l.b16 %v244
  %v308 = vunpack.c.l.b16 %v245
  %v309 = vunpack.c.l.b16 %v246
  %v310 = vpack.c.b16 %v295, %v294
  %v311 = vpack.c.b16 %v297, %v296
  %v312 = vpack.c.b16 %v299, %v298
  %v313 = vpack.c.b16 %v301, %v300
  %v314 = vpack.c.b16 %v303, %v302
  %v315 = vpack.c.b16 %v305, %v304
  %v316 = vpack.c.b16 %v307, %v306
  %v317 = vpack.c.b16 %v309, %v308
  %326 = vmatprep.subr.bf16.mxu0 0
  %327 = vmatpush1.bf16.msra.mxu0 %v310
  %328 = vmatprep.subr.bf16.mxu0 0
  %329 = vmatpush1.bf16.msra.mxu0 %v311
  %330 = vmatprep.subr.bf16.mxu0 0
  %331 = vmatpush1.bf16.msra.mxu0 %v312
  %332 = vmatprep.subr.bf16.mxu0 0
  %333 = vmatpush1.bf16.msra.mxu0 %v313
  %334 = vmatprep.subr.bf16.mxu0 0
  %335 = vmatpush1.bf16.msra.mxu0 %v314
  %336 = vmatprep.subr.bf16.mxu0 0
  %337 = vmatpush1.bf16.msra.mxu0 %v315
  %338 = vmatprep.subr.bf16.mxu0 0
  %339 = vmatpush1.bf16.msra.mxu0 %v316
  %340 = vmatprep.subr.bf16.mxu0 0
  %341 = vmatpush1.bf16.msra.mxu0 %v317
  %342 = vmatprep.subr.bf16.mxu0 0
  %343 = vmatpush1.bf16.msra.mxu0 0
  %344 = vmatprep.subr.bf16.mxu0 0
  %345 = vmatpush1.bf16.msra.mxu0 0
  %346 = vmatprep.subr.bf16.mxu0 0
  %347 = vmatpush1.bf16.msra.mxu0 0
  %348 = vmatprep.subr.bf16.mxu0 0
  %349 = vmatpush1.bf16.msra.mxu0 0
  %350 = vmatprep.subr.bf16.mxu0 0
  %351 = vmatpush1.bf16.msra.mxu0 0
  %352 = vmatprep.subr.bf16.mxu0 0
  %353 = vmatpush1.bf16.msra.mxu0 0
  %354 = vmatprep.subr.bf16.mxu0 0
  %355 = vmatpush1.bf16.msra.mxu0 0
  %356 = vmatprep.subr.bf16.mxu0 0
  %357 = vmatpush1.bf16.msra.mxu0 0
  %358 = vmatprep.mubr.bf16.mxu0 0
  %359 = vmatmul.mubr.bf16.gmra.mrb[0].mxu0 %v270
  %v360 = vpop.f32.mrb[0].mxu0
  %v361 = vadd.f32 %v260, %v360
  %v362 = vpop.f32.mrb[0].mxu0
  %v363 = vpop.f32.mrb[0].mxu0
  %v364 = vadd.f32 %v260, %v363
  %v365 = vpop.f32.mrb[0].mxu0
  %366 = vdwg.mxu0
  %v367 = vld [vmem:[%s7] sm:$0xf]
  %v368 = vld [vmem:[%s7 + $0x4] sm:$0xf]
  %v369 = vld [vmem:[%s7 + $0x8] sm:$0xf]
  %v370 = vld [vmem:[%s7 + $0xc] sm:$0xf]
  %v371 = vld [vmem:[%s7 + $0x10] sm:$0xf]
  %v372 = vld [vmem:[%s7 + $0x14] sm:$0xf]
  %v373 = vld [vmem:[%s7 + $0x18] sm:$0xf]
  %v374 = vld [vmem:[%s7 + $0x1c] sm:$0xf]
  %v375 = vld [vmem:[%s7 + $0x20] sm:$0xf]
  %v376 = vld [vmem:[%s7 + $0x24] sm:$0xf]
  %v377 = vld [vmem:[%s7 + $0x28] sm:$0xf]
  %v378 = vld [vmem:[%s7 + $0x2c] sm:$0xf]
  %v379 = vld [vmem:[%s7 + $0x30] sm:$0xf]
  %v380 = vld [vmem:[%s7 + $0x34] sm:$0xf]
  %v381 = vld [vmem:[%s7 + $0x38] sm:$0xf]
  %v382 = vld [vmem:[%s7 + $0x3c] sm:$0xf]
  %v383 = vpack.c.bf16 %v214, %v213
  %v384 = vld [vmem:[%s8] sm:$0x1]
  %v386 = vlaneseq
  %v387 = vshrl.u32 %v386, 7
  %v388 = vsub.s32 0, %v387
  %v389 = vrot.slane %v384, %v388
  %v407 = vunpack.c.l.b16 %v367
  %v408 = vunpack.c.l.b16 %v368
  %v409 = vunpack.c.l.b16 %v369
  %v410 = vunpack.c.l.b16 %v370
  %v411 = vunpack.c.l.b16 %v371
  %v412 = vunpack.c.l.b16 %v372
  %v413 = vunpack.c.l.b16 %v373
  %v414 = vunpack.c.l.b16 %v374
  %v415 = vunpack.c.l.b16 %v375
  %v416 = vunpack.c.l.b16 %v376
  %v417 = vunpack.c.l.b16 %v377
  %v418 = vunpack.c.l.b16 %v378
  %v419 = vunpack.c.l.b16 %v379
  %v420 = vunpack.c.l.b16 %v380
  %v421 = vunpack.c.l.b16 %v381
  %v422 = vunpack.c.l.b16 %v382
  %v423 = vpack.c.b16 %v408, %v407
  %v424 = vpack.c.b16 %v410, %v409
  %v425 = vpack.c.b16 %v412, %v411
  %v426 = vpack.c.b16 %v414, %v413
  %v427 = vpack.c.b16 %v416, %v415
  %v428 = vpack.c.b16 %v418, %v417
  %v429 = vpack.c.b16 %v420, %v419
  %v430 = vpack.c.b16 %v422, %v421
  %439 = vmatprep.subr.bf16.mxu0 0
  %440 = vmatpush1.bf16.msra.mxu0 %v423
  %441 = vmatprep.subr.bf16.mxu0 0
  %442 = vmatpush1.bf16.msra.mxu0 %v424
  %443 = vmatprep.subr.bf16.mxu0 0
  %444 = vmatpush1.bf16.msra.mxu0 %v425
  %445 = vmatprep.subr.bf16.mxu0 0
  %446 = vmatpush1.bf16.msra.mxu0 %v426
  %447 = vmatprep.subr.bf16.mxu0 0
  %448 = vmatpush1.bf16.msra.mxu0 %v427
  %449 = vmatprep.subr.bf16.mxu0 0
  %450 = vmatpush1.bf16.msra.mxu0 %v428
  %451 = vmatprep.subr.bf16.mxu0 0
  %452 = vmatpush1.bf16.msra.mxu0 %v429
  %453 = vmatprep.subr.bf16.mxu0 0
  %454 = vmatpush1.bf16.msra.mxu0 %v430
  %455 = vmatprep.subr.bf16.mxu0 0
  %456 = vmatpush1.bf16.msra.mxu0 0
  %457 = vmatprep.subr.bf16.mxu0 0
  %458 = vmatpush1.bf16.msra.mxu0 0
  %459 = vmatprep.subr.bf16.mxu0 0
  %460 = vmatpush1.bf16.msra.mxu0 0
  %461 = vmatprep.subr.bf16.mxu0 0
  %462 = vmatpush1.bf16.msra.mxu0 0
  %463 = vmatprep.subr.bf16.mxu0 0
  %464 = vmatpush1.bf16.msra.mxu0 0
  %465 = vmatprep.subr.bf16.mxu0 0
  %466 = vmatpush1.bf16.msra.mxu0 0
  %467 = vmatprep.subr.bf16.mxu0 0
  %468 = vmatpush1.bf16.msra.mxu0 0
  %469 = vmatprep.subr.bf16.mxu0 0
  %470 = vmatpush1.bf16.msra.mxu0 0
  %471 = vmatprep.mubr.bf16.mxu0 0
  %472 = vmatmul.mubr.bf16.gmra.mrb[0].mxu0 %v383
  %v473 = vpop.f32.mrb[0].mxu0
  %v474 = vadd.f32 %v389, %v473
  %v475 = vpop.f32.mrb[0].mxu0
  %v476 = vpop.f32.mrb[0].mxu0
  %v477 = vadd.f32 %v389, %v476
  %v478 = vpop.f32.mrb[0].mxu0
  %479 = vdwg.mxu0
  %v480 = vld [vmem:[%s9] sm:$0xff]
  %v481 = vld [vmem:[%s9 + $0x8] sm:$0xff]
  %v482 = vld [vmem:[%s9 + $0x10] sm:$0xff]
  %v483 = vld [vmem:[%s9 + $0x18] sm:$0xff]
  %v484 = vld [vmem:[%s9 + $0x20] sm:$0xff]
  %v485 = vld [vmem:[%s9 + $0x28] sm:$0xff]
  %v486 = vld [vmem:[%s9 + $0x30] sm:$0xff]
  %v487 = vld [vmem:[%s9 + $0x38] sm:$0xff]
  %v488 = vld [vmem:[%s9 + $0x40] sm:$0xff]
  %v489 = vld [vmem:[%s9 + $0x48] sm:$0xff]
  %v490 = vld [vmem:[%s9 + $0x50] sm:$0xff]
  %v491 = vld [vmem:[%s9 + $0x58] sm:$0xff]
  %v492 = vld [vmem:[%s9 + $0x60] sm:$0xff]
  %v493 = vld [vmem:[%s9 + $0x68] sm:$0xff]
  %v494 = vld [vmem:[%s9 + $0x70] sm:$0xff]
  %v495 = vld [vmem:[%s9 + $0x78] sm:$0xff]
  %v496 = vpack.c.bf16 %v364, %v361
  %v497 = vld [vmem:[%s10] sm:$0x3]
  %v499 = vlaneseq
  %v500 = vshrl.u32 %v499, 7
  %v501 = vsub.s32 0, %v500
  %v502 = vrot.slane %v497, %v501
  %v503 = vlaneseq
  %v504 = vshrl.u32 %v503, 7
  %v505 = vsub.s32 1, %v504
  %v506 = vrot.slane %v497, %v505
  %v525 = vunpack.c.l.b16 %v480
  %v526 = vunpack.c.h.b16 %v480
  %v527 = vunpack.c.l.b16 %v481
  %v528 = vunpack.c.h.b16 %v481
  %v529 = vunpack.c.l.b16 %v482
  %v530 = vunpack.c.h.b16 %v482
  %v531 = vunpack.c.l.b16 %v483
  %v532 = vunpack.c.h.b16 %v483
  %v533 = vunpack.c.l.b16 %v484
  %v534 = vunpack.c.h.b16 %v484
  %v535 = vunpack.c.l.b16 %v485
  %v536 = vunpack.c.h.b16 %v485
  %v537 = vunpack.c.l.b16 %v486
  %v538 = vunpack.c.h.b16 %v486
  %v539 = vunpack.c.l.b16 %v487
  %v540 = vunpack.c.h.b16 %v487
  %v541 = vunpack.c.l.b16 %v488
  %v542 = vunpack.c.h.b16 %v488
  %v543 = vunpack.c.l.b16 %v489
  %v544 = vunpack.c.h.b16 %v489
  %v545 = vunpack.c.l.b16 %v490
  %v546 = vunpack.c.h.b16 %v490
  %v547 = vunpack.c.l.b16 %v491
  %v548 = vunpack.c.h.b16 %v491
  %v549 = vunpack.c.l.b16 %v492
  %v550 = vunpack.c.h.b16 %v492
  %v551 = vunpack.c.l.b16 %v493
  %v552 = vunpack.c.h.b16 %v493
  %v553 = vunpack.c.l.b16 %v494
  %v554 = vunpack.c.h.b16 %v494
  %v555 = vunpack.c.l.b16 %v495
  %v556 = vunpack.c.h.b16 %v495
  %v557 = vpack.c.b16 %v527, %v525
  %v558 = vpack.c.b16 %v528, %v526
  %v559 = vpack.c.b16 %v531, %v529
  %v560 = vpack.c.b16 %v532, %v530
  %v561 = vpack.c.b16 %v535, %v533
  %v562 = vpack.c.b16 %v536, %v534
  %v563 = vpack.c.b16 %v539, %v537
  %v564 = vpack.c.b16 %v540, %v538
  %v565 = vpack.c.b16 %v543, %v541
  %v566 = vpack.c.b16 %v544, %v542
  %v567 = vpack.c.b16 %v547, %v545
  %v568 = vpack.c.b16 %v548, %v546
  %v569 = vpack.c.b16 %v551, %v549
  %v570 = vpack.c.b16 %v552, %v550
  %v571 = vpack.c.b16 %v555, %v553
  %v572 = vpack.c.b16 %v556, %v554
  %589 = vmatprep.subr.bf16.mxu0 %v558
  %590 = vmatpush1.bf16.msra.mxu0 %v557
  %591 = vmatprep.subr.bf16.mxu0 %v560
  %592 = vmatpush1.bf16.msra.mxu0 %v559
  %593 = vmatprep.subr.bf16.mxu0 %v562
  %594 = vmatpush1.bf16.msra.mxu0 %v561
  %595 = vmatprep.subr.bf16.mxu0 %v564
  %596 = vmatpush1.bf16.msra.mxu0 %v563
  %597 = vmatprep.subr.bf16.mxu0 %v566
  %598 = vmatpush1.bf16.msra.mxu0 %v565
  %599 = vmatprep.subr.bf16.mxu0 %v568
  %600 = vmatpush1.bf16.msra.mxu0 %v567
  %601 = vmatprep.subr.bf16.mxu0 %v570
  %602 = vmatpush1.bf16.msra.mxu0 %v569
  %603 = vmatprep.subr.bf16.mxu0 %v572
  %604 = vmatpush1.bf16.msra.mxu0 %v571
  %605 = vmatprep.subr.bf16.mxu0 0
  %606 = vmatpush1.bf16.msra.mxu0 0
  %607 = vmatprep.subr.bf16.mxu0 0
  %608 = vmatpush1.bf16.msra.mxu0 0
  %609 = vmatprep.subr.bf16.mxu0 0
  %610 = vmatpush1.bf16.msra.mxu0 0
  %611 = vmatprep.subr.bf16.mxu0 0
  %612 = vmatpush1.bf16.msra.mxu0 0
  %613 = vmatprep.subr.bf16.mxu0 0
  %614 = vmatpush1.bf16.msra.mxu0 0
  %615 = vmatprep.subr.bf16.mxu0 0
  %616 = vmatpush1.bf16.msra.mxu0 0
  %617 = vmatprep.subr.bf16.mxu0 0
  %618 = vmatpush1.bf16.msra.mxu0 0
  %619 = vmatprep.subr.bf16.mxu0 0
  %620 = vmatpush1.bf16.msra.mxu0 0
  %621 = vmatprep.mubr.bf16.mxu0 0
  %622 = vmatmul.mubr.bf16.gmra.mrb[0].mxu0 %v496
  %v623 = vpop.f32.mrb[0].mxu0
  %v624 = vadd.f32 %v502, %v623
  %v625 = vpop.f32.mrb[0].mxu0
  %v626 = vadd.f32 %v506, %v625
  %v627 = vpop.f32.mrb[0].mxu0
  %v628 = vadd.f32 %v502, %v627
  %v629 = vpop.f32.mrb[0].mxu0
  %v630 = vadd.f32 %v506, %v629
  %631 = vdwg.mxu0
  %v632 = vpack.c.bf16 %v477, %v474
  %v633 = vpack.c.bf16 %v628, %v624
  %634 = vmatprep.subr.bf16.mxu0 0
  %635 = vmatpush1.bf16.xpose.msra.mxu0 %v633
  %636 = vmatprep.subr.bf16.mxu0 0
  %637 = vmatpush1.bf16.xpose.msra.mxu0 0
  %638 = vmatprep.subr.bf16.mxu0 0
  %639 = vmatpush1.bf16.xpose.msra.mxu0 0
  %640 = vmatprep.subr.bf16.mxu0 0
  %641 = vmatpush1.bf16.xpose.msra.mxu0 0
  %642 = vmatprep.subr.bf16.mxu0 0
  %643 = vmatpush1.bf16.xpose.msra.mxu0 0
  %644 = vmatprep.subr.bf16.mxu0 0
  %645 = vmatpush1.bf16.xpose.msra.mxu0 0
  %646 = vmatprep.subr.bf16.mxu0 0
  %647 = vmatpush1.bf16.xpose.msra.mxu0 0
  %648 = vmatprep.subr.bf16.mxu0 0
  %649 = vmatpush1.bf16.xpose.msra.mxu0 0
  %650 = vmatprep.subr.bf16.mxu0 0
  %651 = vmatpush1.bf16.xpose.msra.mxu0 0
  %652 = vmatprep.subr.bf16.mxu0 0
  %653 = vmatpush1.bf16.xpose.msra.mxu0 0
  %654 = vmatprep.subr.bf16.mxu0 0
  %655 = vmatpush1.bf16.xpose.msra.mxu0 0
  %656 = vmatprep.subr.bf16.mxu0 0
  %657 = vmatpush1.bf16.xpose.msra.mxu0 0
  %658 = vmatprep.subr.bf16.mxu0 0
  %659 = vmatpush1.bf16.xpose.msra.mxu0 0
  %660 = vmatprep.subr.bf16.mxu0 0
  %661 = vmatpush1.bf16.xpose.msra.mxu0 0
  %662 = vmatprep.subr.bf16.mxu0 0
  %663 = vmatpush1.bf16.xpose.msra.mxu0 0
  %664 = vmatprep.subr.bf16.mxu0 0
  %665 = vmatpush1.bf16.xpose.msra.mxu0 0
  %666 = vmatprep.mubr.bf16.mxu0 0
  %667 = vmatmul.mubr.bf16.gmra.mrb[0].mxu0 %v632
  %v668 = vpop.f32.mrb[0].mxu0
  %v669 = vadd.f32 0.0, %v668
  %v670 = vpop.f32.mrb[0].mxu0
  %v671 = vpop.f32.mrb[0].mxu0
  %v672 = vadd.f32 0.0, %v671
  %v673 = vpop.f32.mrb[0].mxu0
  %674 = vdwg.mxu0
  %v675 = vmul.f32 %v669, 0.088388346
  %v676 = vmul.f32 %v672, 0.088388346
  %vm677 = vcmask 130048
  %v678 = vsel %vm677, %v675, -inf
  %679 = vmax.xlane.f32.xlu0 %v678
  %v680 = vpop.xlane.xlu0 %679
  %v681 = vsel %vm677, %v676, -inf
  %682 = vmax.xlane.f32.xlu0 %v681
  %v683 = vpop.xlane.xlu0 %682
  %v684 = vsub.f32 %v675, %v680
  %v685 = vsub.f32 %v676, %v683
  %v686 = vmul.f32 %v684, 1.442695
  %v687 = vpow.pop %v686
  %v688 = vmul.f32 %v685, 1.442695
  %v689 = vpow.pop %v688
  %v690 = vsel %vm677, %v687, 0.0
  %691 = vadd.xlane.f32.xlu0 %v690
  %v692 = vpop.xlane.xlu0 %691
  %v693 = vsel %vm677, %v689, 0.0
  %694 = vadd.xlane.f32.xlu0 %v693
  %v695 = vpop.xlane.xlu0 %694
  %v696 = vpack.c.bf16 %v689, %v687
  %v697 = vpack.c.bf16 %v630, %v626
  %v699 = vsel %vm677, %v696, 0
  %701 = vmatprep.subr.bf16.mxu0 0
  %702 = vmatpush1.bf16.msra.mxu0 %v697
  %703 = vmatprep.subr.bf16.mxu0 0
  %704 = vmatpush1.bf16.msra.mxu0 0
  %705 = vmatprep.subr.bf16.mxu0 0
  %706 = vmatpush1.bf16.msra.mxu0 0
  %707 = vmatprep.subr.bf16.mxu0 0
  %708 = vmatpush1.bf16.msra.mxu0 0
  %709 = vmatprep.subr.bf16.mxu0 0
  %710 = vmatpush1.bf16.msra.mxu0 0
  %711 = vmatprep.subr.bf16.mxu0 0
  %712 = vmatpush1.bf16.msra.mxu0 0
  %713 = vmatprep.subr.bf16.mxu0 0
  %714 = vmatpush1.bf16.msra.mxu0 0
  %715 = vmatprep.subr.bf16.mxu0 0
  %716 = vmatpush1.bf16.msra.mxu0 0
  %717 = vmatprep.subr.bf16.mxu0 0
  %718 = vmatpush1.bf16.msra.mxu0 0
  %719 = vmatprep.subr.bf16.mxu0 0
  %720 = vmatpush1.bf16.msra.mxu0 0
  %721 = vmatprep.subr.bf16.mxu0 0
  %722 = vmatpush1.bf16.msra.mxu0 0
  %723 = vmatprep.subr.bf16.mxu0 0
  %724 = vmatpush1.bf16.msra.mxu0 0
  %725 = vmatprep.subr.bf16.mxu0 0
  %726 = vmatpush1.bf16.msra.mxu0 0
  %727 = vmatprep.subr.bf16.mxu0 0
  %728 = vmatpush1.bf16.msra.mxu0 0
  %729 = vmatprep.subr.bf16.mxu0 0
  %730 = vmatpush1.bf16.msra.mxu0 0
  %731 = vmatprep.subr.bf16.mxu0 0
  %732 = vmatpush1.bf16.msra.mxu0 0
  %733 = vmatprep.mubr.bf16.mxu0 0
  %734 = vmatmul.mubr.bf16.gmra.mrb[0].mxu0 %v699
  %v735 = vpop.f32.mrb[0].mxu0
  %v736 = vadd.f32 0.0, %v735
  %v737 = vpop.f32.mrb[0].mxu0
  %v738 = vpop.f32.mrb[0].mxu0
  %v739 = vadd.f32 0.0, %v738
  %v740 = vpop.f32.mrb[0].mxu0
  %741 = vdwg.mxu0
  %v742 = vrcp.pop %v692
  %v743 = vrcp.pop %v695
  %v744 = vmul.f32 %v736, %v742
  %v745 = vmul.f32 %v739, %v743
  %v746 = vadd.f32 %v213, %v744
  %v747 = vadd.f32 %v214, %v745
  %v748 = vld [vmem:[%s11] sm:$0xf]
  %v749 = vld [vmem:[%s11 + $0x4] sm:$0xf]
  %v750 = vld [vmem:[%s11 + $0x8] sm:$0xf]
  %v751 = vld [vmem:[%s11 + $0xc] sm:$0xf]
  %v752 = vld [vmem:[%s11 + $0x10] sm:$0xf]
  %v753 = vld [vmem:[%s11 + $0x14] sm:$0xf]
  %v754 = vld [vmem:[%s11 + $0x18] sm:$0xf]
  %v755 = vld [vmem:[%s11 + $0x1c] sm:$0xf]
  %v756 = vld [vmem:[%s11 + $0x20] sm:$0xf]
  %v757 = vld [vmem:[%s11 + $0x24] sm:$0xf]
  %v758 = vld [vmem:[%s11 + $0x28] sm:$0xf]
  %v759 = vld [vmem:[%s11 + $0x2c] sm:$0xf]
  %v760 = vld [vmem:[%s11 + $0x30] sm:$0xf]
  %v761 = vld [vmem:[%s11 + $0x34] sm:$0xf]
  %v762 = vld [vmem:[%s11 + $0x38] sm:$0xf]
  %v763 = vld [vmem:[%s11 + $0x3c] sm:$0xf]
  %v764 = vpack.c.bf16 %v747, %v746
  %v765 = vld [vmem:[%s12] sm:$0x1]
  %v767 = vlaneseq
  %v768 = vshrl.u32 %v767, 7
  %v769 = vsub.s32 0, %v768
  %v770 = vrot.slane %v765, %v769
  %v788 = vunpack.c.l.b16 %v748
  %v789 = vunpack.c.l.b16 %v749
  %v790 = vunpack.c.l.b16 %v750
  %v791 = vunpack.c.l.b16 %v751
  %v792 = vunpack.c.l.b16 %v752
  %v793 = vunpack.c.l.b16 %v753
  %v794 = vunpack.c.l.b16 %v754
  %v795 = vunpack.c.l.b16 %v755
  %v796 = vunpack.c.l.b16 %v756
  %v797 = vunpack.c.l.b16 %v757
  %v798 = vunpack.c.l.b16 %v758
  %v799 = vunpack.c.l.b16 %v759
  %v800 = vunpack.c.l.b16 %v760
  %v801 = vunpack.c.l.b16 %v761
  %v802 = vunpack.c.l.b16 %v762
  %v803 = vunpack.c.l.b16 %v763
  %v804 = vpack.c.b16 %v789, %v788
  %v805 = vpack.c.b16 %v791, %v790
  %v806 = vpack.c.b16 %v793, %v792
  %v807 = vpack.c.b16 %v795, %v794
  %v808 = vpack.c.b16 %v797, %v796
  %v809 = vpack.c.b16 %v799, %v798
  %v810 = vpack.c.b16 %v801, %v800
  %v811 = vpack.c.b16 %v803, %v802
  %820 = vmatprep.subr.bf16.mxu0 0
  %821 = vmatpush1.bf16.msra.mxu0 %v804
  %822 = vmatprep.subr.bf16.mxu0 0
  %823 = vmatpush1.bf16.msra.mxu0 %v805
  %824 = vmatprep.subr.bf16.mxu0 0
  %825 = vmatpush1.bf16.msra.mxu0 %v806
  %826 = vmatprep.subr.bf16.mxu0 0
  %827 = vmatpush1.bf16.msra.mxu0 %v807
  %828 = vmatprep.subr.bf16.mxu0 0
  %829 = vmatpush1.bf16.msra.mxu0 %v808
  %830 = vmatprep.subr.bf16.mxu0 0
  %831 = vmatpush1.bf16.msra.mxu0 %v809
  %832 = vmatprep.subr.bf16.mxu0 0
  %833 = vmatpush1.bf16.msra.mxu0 %v810
  %834 = vmatprep.subr.bf16.mxu0 0
  %835 = vmatpush1.bf16.msra.mxu0 %v811
  %836 = vmatprep.subr.bf16.mxu0 0
  %837 = vmatpush1.bf16.msra.mxu0 0
  %838 = vmatprep.subr.bf16.mxu0 0
  %839 = vmatpush1.bf16.msra.mxu0 0
  %840 = vmatprep.subr.bf16.mxu0 0
  %841 = vmatpush1.bf16.msra.mxu0 0
  %842 = vmatprep.subr.bf16.mxu0 0
  %843 = vmatpush1.bf16.msra.mxu0 0
  %844 = vmatprep.subr.bf16.mxu0 0
  %845 = vmatpush1.bf16.msra.mxu0 0
  %846 = vmatprep.subr.bf16.mxu0 0
  %847 = vmatpush1.bf16.msra.mxu0 0
  %848 = vmatprep.subr.bf16.mxu0 0
  %849 = vmatpush1.bf16.msra.mxu0 0
  %850 = vmatprep.subr.bf16.mxu0 0
  %851 = vmatpush1.bf16.msra.mxu0 0
  %852 = vmatprep.mubr.bf16.mxu0 0
  %853 = vmatmul.mubr.bf16.gmra.mrb[0].mxu0 %v764
  %v854 = vpop.f32.mrb[0].mxu0
  %v855 = vadd.f32 %v770, %v854
  %v856 = vpop.f32.mrb[0].mxu0
  %v857 = vpop.f32.mrb[0].mxu0
  %v858 = vadd.f32 %v770, %v857
  %v859 = vpop.f32.mrb[0].mxu0
  %860 = vdwg.mxu0
  %v861 = vmax.f32 %v855, 0.0
  %v862 = vmax.f32 %v858, 0.0
  %v863 = vld [vmem:[%s13] sm:$0xf]
  %v864 = vld [vmem:[%s13 + $0x4] sm:$0xf]
  %v865 = vld [vmem:[%s13 + $0x8] sm:$0xf]
  %v866 = vld [vmem:[%s13 + $0xc] sm:$0xf]
  %v867 = vld [vmem:[%s13 + $0x10] sm:$0xf]
  %v868 = vld [vmem:[%s13 + $0x14] sm:$0xf]
  %v869 = vld [vmem:[%s13 + $0x18] sm:$0xf]
  %v870 = vld [vmem:[%s13 + $0x1c] sm:$0xf]
  %v871 = vld [vmem:[%s13 + $0x20] sm:$0xf]
  %v872 = vld [vmem:[%s13 + $0x24] sm:$0xf]
  %v873 = vld [vmem:[%s13 + $0x28] sm:$0xf]
  %v874 = vld [vmem:[%s13 + $0x2c] sm:$0xf]
  %v875 = vld [vmem:[%s13 + $0x30] sm:$0xf]
  %v876 = vld [vmem:[%s13 + $0x34] sm:$0xf]
  %v877 = vld [vmem:[%s13 + $0x38] sm:$0xf]
  %v878 = vld [vmem:[%s13 + $0x3c] sm:$0xf]
  %v879 = vpack.c.bf16 %v862, %v861
  %v896 = vunpack.c.l.b16 %v863
  %v897 = vunpack.c.l.b16 %v864
  %v898 = vunpack.c.l.b16 %v865
  %v899 = vunpack.c.l.b16 %v866
  %v900 = vunpack.c.l.b16 %v867
  %v901 = vunpack.c.l.b16 %v868
  %v902 = vunpack.c.l.b16 %v869
  %v903 = vunpack.c.l.b16 %v870
  %v904 = vunpack.c.l.b16 %v871
  %v905 = vunpack.c.l.b16 %v872
  %v906 = vunpack.c.l.b16 %v873
  %v907 = vunpack.c.l.b16 %v874
  %v908 = vunpack.c.l.b16 %v875
  %v909 = vunpack.c.l.b16 %v876
  %v910 = vunpack.c.l.b16 %v877
  %v911 = vunpack.c.l.b16 %v878
  %v912 = vpack.c.b16 %v897, %v896
  %v913 = vpack.c.b16 %v899, %v898
  %v914 = vpack.c.b16 %v901, %v900
  %v915 = vpack.c.b16 %v903, %v902
  %v916 = vpack.c.b16 %v905, %v904
  %v917 = vpack.c.b16 %v907, %v906
  %v918 = vpack.c.b16 %v909, %v908
  %v919 = vpack.c.b16 %v911, %v910
  %928 = vmatprep.subr.bf16.mxu0 0
  %929 = vmatpush1.bf16.msra.mxu0 %v912
  %930 = vmatprep.subr.bf16.mxu0 0
  %931 = vmatpush1.bf16.msra.mxu0 %v913
  %932 = vmatprep.subr.bf16.mxu0 0
  %933 = vmatpush1.bf16.msra.mxu0 %v914
  %934 = vmatprep.subr.bf16.mxu0 0
  %935 = vmatpush1.bf16.msra.mxu0 %v915
  %936 = vmatprep.subr.bf16.mxu0 0
  %937 = vmatpush1.bf16.msra.mxu0 %v916
  %938 = vmatprep.subr.bf16.mxu0 0
  %939 = vmatpush1.bf16.msra.mxu0 %v917
  %940 = vmatprep.subr.bf16.mxu0 0
  %941 = vmatpush1.bf16.msra.mxu0 %v918
  %942 = vmatprep.subr.bf16.mxu0 0
  %943 = vmatpush1.bf16.msra.mxu0 %v919
  %944 = vmatprep.subr.bf16.mxu0 0
  %945 = vmatpush1.bf16.msra.mxu0 0
  %946 = vmatprep.subr.bf16.mxu0 0
  %947 = vmatpush1.bf16.msra.mxu0 0
  %948 = vmatprep.subr.bf16.mxu0 0
  %949 = vmatpush1.bf16.msra.mxu0 0
  %950 = vmatprep.subr.bf16.mxu0 0
  %951 = vmatpush1.bf16.msra.mxu0 0
  %952 = vmatprep.subr.bf16.mxu0 0
  %953 = vmatpush1.bf16.msra.mxu0 0
  %954 = vmatprep.subr.bf16.mxu0 0
  %955 = vmatpush1.bf16.msra.mxu0 0
  %956 = vmatprep.subr.bf16.mxu0 0
  %957 = vmatpush1.bf16.msra.mxu0 0
  %958 = vmatprep.subr.bf16.mxu0 0
  %959 = vmatpush1.bf16.msra.mxu0 0
  %960 = vmatprep.mubr.bf16.mxu0 0
  %961 = vmatmul.mubr.bf16.gmra.mrb[0].mxu0 %v879
  %v962 = vpop.f32.mrb[0].mxu0
  %v963 = vadd.f32 0.0, %v962
  %v964 = vpop.f32.mrb[0].mxu0
  %v965 = vpop.f32.mrb[0].mxu0
  %v966 = vadd.f32 0.0, %v965
  %v967 = vpop.f32.mrb[0].mxu0
  %968 = vdwg.mxu0
  %v969 = vadd.f32 %v746, %v963
  %v970 = vadd.f32 %v747, %v966
  %v971 = vld [vmem:[%s14] sm:$0x1]
  %v973 = vlaneseq
  %v974 = vshrl.u32 %v973, 7
  %v975 = vsub.s32 0, %v974
  %v976 = vrot.slane %v971, %v975
  %v978 = vadd.f32 %v969, %v976
  %v979 = vadd.f32 %v970, %v976
  %v980 = vld [vmem:[%s15] sm:$0xf]
  %v981 = vld [vmem:[%s15 + $0x4] sm:$0xf]
  %v982 = vld [vmem:[%s15 + $0x8] sm:$0xf]
  %v983 = vld [vmem:[%s15 + $0xc] sm:$0xf]
  %v984 = vld [vmem:[%s15 + $0x10] sm:$0xf]
  %v985 = vld [vmem:[%s15 + $0x14] sm:$0xf]
  %v986 = vld [vmem:[%s15 + $0x18] sm:$0xf]
  %v987 = vld [vmem:[%s15 + $0x1c] sm:$0xf]
  %v988 = vld [vmem:[%s15 + $0x20] sm:$0xf]
  %v989 = vld [vmem:[%s15 + $0x24] sm:$0xf]
  %v990 = vld [vmem:[%s15 + $0x28] sm:$0xf]
  %v991 = vld [vmem:[%s15 + $0x2c] sm:$0xf]
  %v992 = vld [vmem:[%s15 + $0x30] sm:$0xf]
  %v993 = vld [vmem:[%s15 + $0x34] sm:$0xf]
  %v994 = vld [vmem:[%s15 + $0x38] sm:$0xf]
  %v995 = vld [vmem:[%s15 + $0x3c] sm:$0xf]
  %v996 = vpack.c.bf16 %v979, %v978
  %v997 = vld [vmem:[%s16] sm:$0x1]
  %v999 = vlaneseq
  %v1000 = vshrl.u32 %v999, 7
  %v1001 = vsub.s32 0, %v1000
  %v1002 = vrot.slane %v997, %v1001
  %v1020 = vunpack.c.l.b16 %v980
  %v1021 = vunpack.c.l.b16 %v981
  %v1022 = vunpack.c.l.b16 %v982
  %v1023 = vunpack.c.l.b16 %v983
  %v1024 = vunpack.c.l.b16 %v984
  %v1025 = vunpack.c.l.b16 %v985
  %v1026 = vunpack.c.l.b16 %v986
  %v1027 = vunpack.c.l.b16 %v987
  %v1028 = vunpack.c.l.b16 %v988
  %v1029 = vunpack.c.l.b16 %v989
  %v1030 = vunpack.c.l.b16 %v990
  %v1031 = vunpack.c.l.b16 %v991
  %v1032 = vunpack.c.l.b16 %v992
  %v1033 = vunpack.c.l.b16 %v993
  %v1034 = vunpack.c.l.b16 %v994
  %v1035 = vunpack.c.l.b16 %v995
  %v1036 = vpack.c.b16 %v1021, %v1020
  %v1037 = vpack.c.b16 %v1023, %v1022
  %v1038 = vpack.c.b16 %v1025, %v1024
  %v1039 = vpack.c.b16 %v1027, %v1026
  %v1040 = vpack.c.b16 %v1029, %v1028
  %v1041 = vpack.c.b16 %v1031, %v1030
  %v1042 = vpack.c.b16 %v1033, %v1032
  %v1043 = vpack.c.b16 %v1035, %v1034
  %1052 = vmatprep.subr.bf16.mxu0 0
  %1053 = vmatpush1.bf16.msra.mxu0 %v1036
  %1054 = vmatprep.subr.bf16.mxu0 0
  %1055 = vmatpush1.bf16.msra.mxu0 %v1037
  %1056 = vmatprep.subr.bf16.mxu0 0
  %1057 = vmatpush1.bf16.msra.mxu0 %v1038
  %1058 = vmatprep.subr.bf16.mxu0 0
  %1059 = vmatpush1.bf16.msra.mxu0 %v1039
  %1060 = vmatprep.subr.bf16.mxu0 0
  %1061 = vmatpush1.bf16.msra.mxu0 %v1040
  %1062 = vmatprep.subr.bf16.mxu0 0
  %1063 = vmatpush1.bf16.msra.mxu0 %v1041
  %1064 = vmatprep.subr.bf16.mxu0 0
  %1065 = vmatpush1.bf16.msra.mxu0 %v1042
  %1066 = vmatprep.subr.bf16.mxu0 0
  %1067 = vmatpush1.bf16.msra.mxu0 %v1043
  %1068 = vmatprep.subr.bf16.mxu0 0
  %1069 = vmatpush1.bf16.msra.mxu0 0
  %1070 = vmatprep.subr.bf16.mxu0 0
  %1071 = vmatpush1.bf16.msra.mxu0 0
  %1072 = vmatprep.subr.bf16.mxu0 0
  %1073 = vmatpush1.bf16.msra.mxu0 0
  %1074 = vmatprep.subr.bf16.mxu0 0
  %1075 = vmatpush1.bf16.msra.mxu0 0
  %1076 = vmatprep.subr.bf16.mxu0 0
  %1077 = vmatpush1.bf16.msra.mxu0 0
  %1078 = vmatprep.subr.bf16.mxu0 0
  %1079 = vmatpush1.bf16.msra.mxu0 0
  %1080 = vmatprep.subr.bf16.mxu0 0
  %1081 = vmatpush1.bf16.msra.mxu0 0
  %1082 = vmatprep.subr.bf16.mxu0 0
  %1083 = vmatpush1.bf16.msra.mxu0 0
  %1084 = vmatprep.mubr.bf16.mxu0 0
  %1085 = vmatmul.mubr.bf16.gmra.mrb[0].mxu0 %v996
  %v1086 = vpop.f32.mrb[0].mxu0
  %v1087 = vadd.f32 %v1002, %v1086
  %v1088 = vpop.f32.mrb[0].mxu0
  %v1089 = vpop.f32.mrb[0].mxu0
  %v1090 = vadd.f32 %v1002, %v1089
  %v1091 = vpop.f32.mrb[0].mxu0
  %1092 = vdwg.mxu0
  %1093 = vmax.xlane.f32.xlu0 %v1087
  %v1094 = vpop.xlane.xlu0 %1093
  %1095 = vmax.xlane.f32.xlu0 %v1090
  %v1096 = vpop.xlane.xlu0 %1095
  %v1097 = vlaneseq
  %v1098 = vand.u32 %v1097, 127
  %v1099 = vcvt.s32.f32 %v1098
  %vm1100 = vcmp.eq.f32.partialorder %v1087, %v1094
  %vm1101 = vcmp.eq.f32.partialorder %v1090, %v1096
  %v1102 = vsub.f32 0.0, %v1099
  %v1103 = vsel %vm1100, %v1102, -inf
  %v1104 = vsel %vm1101, %v1102, -inf
  %1105 = vmax.xlane.f32.xlu0 %v1103
  %v1106 = vpop.xlane.xlu0 %1105
  %1107 = vmax.xlane.f32.xlu0 %v1104
  %v1108 = vpop.xlane.xlu0 %1107
  %v1109 = vsub.f32 0.0, %v1106
  %v1110 = vsub.f32 0.0, %v1108
  %v1111 = vcvt.f32.s32.to.zero.pseudo %v1109
  %v1112 = vcvt.f32.s32.to.zero.pseudo %v1110
  %vm1113 = vcmask 7168
  %1114 = vst.msk [vmem:[%s17] sm:$0xff] %vm1113, %v1111
  %1115 = vst.msk [vmem:[%s17 + $0x8] sm:$0xff] %vm1113, %v1112
  // Predicated region
  $region70: #{gpt_sovits_forward.2} parent=0 // pred_check
    _
  $region71: #{gpt_sovits_forward.2} parent=0 // pred_check_branch
    %1117 = sbr.rel (0) target = $region73
  $region72: #{gpt_sovits_forward.2} parent=0 // pred_region
    _
  $region73: #{gpt_sovits_forward.2} parent=0 // pred_fallthru
    _
  // Predicated region
  $region74: #{gpt_sovits_forward.2} parent=0 // pred_check
    _
  $region75: #{gpt_sovits_forward.2} parent=0 // pred_check_branch
    %1119 = sbr.rel (0) target = $region77
  $region76: #{gpt_sovits_forward.2} parent=0 // pred_region
    _
  $region77: #{gpt_sovits_forward.2} parent=0 // pred_fallthru
    _

</llo_original>
